<compile_context>
chip_gen: v6e
topology: v6e:2x2x1
jax: 0.10.0
libtpu: 0.0.40
codegen_flags: <defaults>
</compile_context>

<pallas_src>
import jax
import jax.numpy as jnp
from jax.experimental import pallas as pl
from jax.experimental.pallas import tpu as pltpu

VOCAB_SIZE = 20
EMBED_SIZE = 10
HIDDEN_SIZE = 15
SEQ_LEN = 8
GATE_SLAB = 128          # each gate padded to a full 128-lane slab


# ------------------------- Pallas kernel (hot path) -------------------------

def bigru_kernel(ids_ref, proj_f_ref, proj_b_ref, wrec_ref, bhh_n_ref,
                 out_ref, h_ref, acc_f_ref, acc_b_ref):
    """Fused bidirectional GRU.

    Layout per 128-lane gate slab: lanes [0:H) = forward dir, [H:2H) = backward
    dir, rest zero.  Gate order along the 384 lanes: [r | z | n].
    """
    T = out_ref.shape[0]
    H = h_ref.shape[1]
    S = GATE_SLAB

    # Hoist weight/bias loads out of the unrolled recurrence.
    wrec = wrec_ref[...]        # (128, 384) block-diagonal recurrent weights
    bhh_n = bhh_n_ref[...]      # (1, 128)   recurrent bias of the n gate

    # Precompute the fused input projections (independent of h, so they sit
    # off the serial critical path): forward part from token t, backward part
    # from token T-1-t; the two tables occupy disjoint lanes, so '+' merges.
    gis = []
    for t in range(T):
        tf = ids_ref[t]
        tb = ids_ref[T - 1 - t]
        tf = jnp.where(tf > VOCAB_SIZE, 3, tf)   # x[x > vocab_size] = 3
        tb = jnp.where(tb > VOCAB_SIZE, 3, tb)
        gis.append(proj_f_ref[pl.ds(tf, 1), :] + proj_b_ref[pl.ds(tb, 1), :])

    h = jnp.zeros((1, S), jnp.float32)           # fwd in lanes 0:H, bwd in H:2H
    for t in range(T):
        gi = gis[t]                                                 # (1, 384)
        gh = jnp.dot(h, wrec, preferred_element_type=jnp.float32)   # (1, 384)
        r = jax.nn.sigmoid(gi[:, 0:S] + gh[:, 0:S])
        z = jax.nn.sigmoid(gi[:, S:2 * S] + gh[:, S:2 * S])
        n = jnp.tanh(gi[:, 2 * S:3 * S] + r * (gh[:, 2 * S:3 * S] + bhh_n))
        h = (1.0 - z) * n + z * h

        # Full-lane, single-sublane stores into the VMEM accumulators.
        acc_f_ref[t:t + 1, :] = h                # forward output at time t
        acc_b_ref[T - 1 - t:T - t, :] = h        # backward output at time T-1-t

    # Dense final writes (2 lane-sliced stores total, off the serial path).
    out_ref[:, 0:H] = acc_f_ref[:, 0:H]
    out_ref[:, H:2 * H] = acc_b_ref[:, H:2 * H]
    h_ref[0:1, :] = h[:, 0:H]
    h_ref[1:2, :] = h[:, H:2 * H]


# --------------------- offline parameter preparation ------------------------

def prepare_kernel_params(params):
    """One-time ('offline') fold of embedding + input weights + biases into the
    lane-aligned tables consumed by the kernel."""
    H = HIDDEN_SIZE
    S = GATE_SLAB
    V = VOCAB_SIZE

    def input_proj(wih, bih, bhh):
        gi = params["embed"] @ wih + bih                   # (V, 3H)
        # fold the recurrent bias of r and z; n's recurrent bias stays inside
        # r * (W_hn h + b_hn) and is applied in-kernel.
        return gi.at[:, 0:2 * H].add(bhh[0, 0:2 * H])

    gi_f = input_proj(params["wih_f"], params["bih_f"], params["bhh_f"])
    gi_b = input_proj(params["wih_b"], params["bih_b"], params["bhh_b"])

    proj_f = jnp.zeros((V, 3 * S), jnp.float32)
    proj_b = jnp.zeros((V, 3 * S), jnp.float32)
    wrec = jnp.zeros((S, 3 * S), jnp.float32)
    for g in range(3):
        proj_f = proj_f.at[:, g * S:g * S + H].set(gi_f[:, g * H:(g + 1) * H])
        proj_b = proj_b.at[:, g * S + H:g * S + 2 * H].set(gi_b[:, g * H:(g + 1) * H])
        wrec = wrec.at[0:H, g * S:g * S + H].set(
            params["whh_f"][:, g * H:(g + 1) * H])
        wrec = wrec.at[H:2 * H, g * S + H:g * S + 2 * H].set(
            params["whh_b"][:, g * H:(g + 1) * H])

    bhh_n = jnp.zeros((1, S), jnp.float32)
    bhh_n = bhh_n.at[:, 0:H].set(params["bhh_f"][:, 2 * H:3 * H])
    bhh_n = bhh_n.at[:, H:2 * H].set(params["bhh_b"][:, 2 * H:3 * H])

    return dict(proj_f=proj_f, proj_b=proj_b, wrec=wrec, bhh_n=bhh_n)


# ------------------------------ JAX wrapper ---------------------------------

def encoder_forward(x_ids, kparams):
    T = x_ids.shape[0]
    H = HIDDEN_SIZE
    vmem = pl.BlockSpec(memory_space=pltpu.MemorySpace.VMEM)
    smem = pl.BlockSpec(memory_space=pltpu.MemorySpace.SMEM)

    out, h = pl.pallas_call(
        bigru_kernel,
        in_specs=[smem, vmem, vmem, vmem, vmem],
        out_specs=[vmem, vmem],
        out_shape=[
            jax.ShapeDtypeStruct((T, 2 * H), jnp.float32),   # out (T, 2H)
            jax.ShapeDtypeStruct((2, H), jnp.float32),        # h   (2, H)
        ],
        scratch_shapes=[
            pltpu.VMEM((T, GATE_SLAB), jnp.float32),          # forward acc
            pltpu.VMEM((T, GATE_SLAB), jnp.float32),          # backward acc
        ],
    )(x_ids.astype(jnp.int32), kparams["proj_f"], kparams["proj_b"],
      kparams["wrec"], kparams["bhh_n"])
    return out, h


# --------------------------- parameter init (deterministic) -----------------

def init_params(key):
    keys = jax.random.split(key, 9)
    k = 1.0 / (HIDDEN_SIZE ** 0.5)

    def u(kk, shape):
        return jax.random.uniform(kk, shape, jnp.float32, -k, k)

    return dict(
        embed=jax.random.normal(keys[0], (VOCAB_SIZE, EMBED_SIZE), jnp.float32),
        wih_f=u(keys[1], (EMBED_SIZE, 3 * HIDDEN_SIZE)),
        whh_f=u(keys[2], (HIDDEN_SIZE, 3 * HIDDEN_SIZE)),
        bih_f=u(keys[3], (1, 3 * HIDDEN_SIZE)),
        bhh_f=u(keys[4], (1, 3 * HIDDEN_SIZE)),
        wih_b=u(keys[5], (EMBED_SIZE, 3 * HIDDEN_SIZE)),
        whh_b=u(keys[6], (HIDDEN_SIZE, 3 * HIDDEN_SIZE)),
        bih_b=u(keys[7], (1, 3 * HIDDEN_SIZE)),
        bhh_b=u(keys[8], (1, 3 * HIDDEN_SIZE)),
    )


# --------------------------- pure-JAX reference -----------------------------

def reference_forward(x_ids, params):
    ids = jnp.where(x_ids > VOCAB_SIZE, 3, x_ids)
    emb = params["embed"][ids]
    H = HIDDEN_SIZE
    T = emb.shape[0]

    def cell(x, h, wih, whh, bih, bhh):
        gi = x @ wih + bih
        gh = h @ whh + bhh
        r = jax.nn.sigmoid(gi[:, :H] + gh[:, :H])
        z = jax.nn.sigmoid(gi[:, H:2 * H] + gh[:, H:2 * H])
        n = jnp.tanh(gi[:, 2 * H:] + r * gh[:, 2 * H:])
        return (1.0 - z) * n + z * h

    h_f = jnp.zeros((1, H), jnp.float32)
    h_b = jnp.zeros((1, H), jnp.float32)
    outs_f, outs_b = [], [None] * T
    for t in range(T):
        h_f = cell(emb[t:t + 1], h_f, params["wih_f"], params["whh_f"],
                   params["bih_f"], params["bhh_f"])
        outs_f.append(h_f)
    for t in range(T - 1, -1, -1):
        h_b = cell(emb[t:t + 1], h_b, params["wih_b"], params["whh_b"],
                   params["bih_b"], params["bhh_b"])
        outs_b[t] = h_b
    out = jnp.concatenate(
        [jnp.concatenate(outs_f, 0), jnp.concatenate(outs_b, 0)], axis=-1)
    h = jnp.concatenate([h_f, h_b], axis=0)
    return out, h


# --------------------------------- main --------------------------------------

if __name__ == "__main__":
    key = jax.random.PRNGKey(0)
    pkey, xkey = jax.random.split(key)
    params = init_params(pkey)
    kparams = prepare_kernel_params(params)      # one-time offline precompute

    x = jax.random.randint(xkey, (SEQ_LEN,), 0, VOCAB_SIZE, dtype=jnp.int32)
    x = x.at[2].set(VOCAB_SIZE + 5)  # exercises the `x[x > vocab_size] = 3` path

    out, h = jax.jit(lambda ids: encoder_forward(ids, kparams))(x)
    jax.block_until_ready((out, h))

    out_ref, h_ref = reference_forward(x, params)
    assert out.shape == (SEQ_LEN, 2 * HIDDEN_SIZE), out.shape
    assert h.shape == (2, HIDDEN_SIZE), h.shape
    assert jnp.allclose(out, out_ref, rtol=3e-4, atol=3e-5), "out mismatch"
    assert jnp.allclose(h, h_ref, rtol=3e-4, atol=3e-5), "h mismatch"

    print("KERNEL_OK")
</pallas_src>

<mosaic_0001>
module attributes {stable_mosaic.version = 11 : i64} {
  func.func @bigru_kernel(%arg0: memref<8xi32, #tpu.memory_space<smem>>, %arg1: memref<20x384xf32, #tpu.memory_space<vmem>>, %arg2: memref<20x384xf32, #tpu.memory_space<vmem>>, %arg3: memref<128x384xf32, #tpu.memory_space<vmem>>, %arg4: memref<1x128xf32, #tpu.memory_space<vmem>>, %arg5: memref<8x30xf32, #tpu.memory_space<vmem>>, %arg6: memref<2x15xf32, #tpu.memory_space<vmem>>, %arg7: memref<8x128xf32, #tpu.memory_space<vmem>>, %arg8: memref<8x128xf32, #tpu.memory_space<vmem>>) attributes {dimension_semantics = [], scalar_prefetch = 0 : i64, scratch_operands = 2 : i64, tpu.core_type = #tpu.core_type<tc>} {
    %c0 = arith.constant 0 : index
    %c0_0 = arith.constant 0 : index
    %0 = vector.load %arg3[%c0, %c0_0] : memref<128x384xf32, #tpu.memory_space<vmem>>, vector<128x384xf32>
    %c0_1 = arith.constant 0 : index
    %c0_2 = arith.constant 0 : index
    %1 = vector.load %arg4[%c0_1, %c0_2] : memref<1x128xf32, #tpu.memory_space<vmem>>, vector<1x128xf32>
    %c0_3 = arith.constant 0 : index
    %2 = memref.load %arg0[%c0_3] : memref<8xi32, #tpu.memory_space<smem>>
    %c7 = arith.constant 7 : index
    %3 = memref.load %arg0[%c7] : memref<8xi32, #tpu.memory_space<smem>>
    %c20_i32 = arith.constant 20 : i32
    %4 = arith.cmpi sgt, %2, %c20_i32 : i32
    %c3_i32 = arith.constant 3 : i32
    %5 = arith.select %4, %c3_i32, %2 : i32
    %c20_i32_4 = arith.constant 20 : i32
    %6 = arith.cmpi sgt, %3, %c20_i32_4 : i32
    %c3_i32_5 = arith.constant 3 : i32
    %7 = arith.select %6, %c3_i32_5, %3 : i32
    %8 = arith.index_cast %5 : i32 to index
    %c0_6 = arith.constant 0 : index
    %9 = vector.load %arg1[%8, %c0_6] : memref<20x384xf32, #tpu.memory_space<vmem>>, vector<1x384xf32>
    %10 = arith.index_cast %7 : i32 to index
    %c0_7 = arith.constant 0 : index
    %11 = vector.load %arg2[%10, %c0_7] : memref<20x384xf32, #tpu.memory_space<vmem>>, vector<1x384xf32>
    %12 = arith.addf %9, %11 : vector<1x384xf32>
    %c1 = arith.constant 1 : index
    %13 = memref.load %arg0[%c1] : memref<8xi32, #tpu.memory_space<smem>>
    %c6 = arith.constant 6 : index
    %14 = memref.load %arg0[%c6] : memref<8xi32, #tpu.memory_space<smem>>
    %c20_i32_8 = arith.constant 20 : i32
    %15 = arith.cmpi sgt, %13, %c20_i32_8 : i32
    %c3_i32_9 = arith.constant 3 : i32
    %16 = arith.select %15, %c3_i32_9, %13 : i32
    %c20_i32_10 = arith.constant 20 : i32
    %17 = arith.cmpi sgt, %14, %c20_i32_10 : i32
    %c3_i32_11 = arith.constant 3 : i32
    %18 = arith.select %17, %c3_i32_11, %14 : i32
    %19 = arith.index_cast %16 : i32 to index
    %c0_12 = arith.constant 0 : index
    %20 = vector.load %arg1[%19, %c0_12] : memref<20x384xf32, #tpu.memory_space<vmem>>, vector<1x384xf32>
    %21 = arith.index_cast %18 : i32 to index
    %c0_13 = arith.constant 0 : index
    %22 = vector.load %arg2[%21, %c0_13] : memref<20x384xf32, #tpu.memory_space<vmem>>, vector<1x384xf32>
    %23 = arith.addf %20, %22 : vector<1x384xf32>
    %c2 = arith.constant 2 : index
    %24 = memref.load %arg0[%c2] : memref<8xi32, #tpu.memory_space<smem>>
    %c5 = arith.constant 5 : index
    %25 = memref.load %arg0[%c5] : memref<8xi32, #tpu.memory_space<smem>>
    %c20_i32_14 = arith.constant 20 : i32
    %26 = arith.cmpi sgt, %24, %c20_i32_14 : i32
    %c3_i32_15 = arith.constant 3 : i32
    %27 = arith.select %26, %c3_i32_15, %24 : i32
    %c20_i32_16 = arith.constant 20 : i32
    %28 = arith.cmpi sgt, %25, %c20_i32_16 : i32
    %c3_i32_17 = arith.constant 3 : i32
    %29 = arith.select %28, %c3_i32_17, %25 : i32
    %30 = arith.index_cast %27 : i32 to index
    %c0_18 = arith.constant 0 : index
    %31 = vector.load %arg1[%30, %c0_18] : memref<20x384xf32, #tpu.memory_space<vmem>>, vector<1x384xf32>
    %32 = arith.index_cast %29 : i32 to index
    %c0_19 = arith.constant 0 : index
    %33 = vector.load %arg2[%32, %c0_19] : memref<20x384xf32, #tpu.memory_space<vmem>>, vector<1x384xf32>
    %34 = arith.addf %31, %33 : vector<1x384xf32>
    %c3 = arith.constant 3 : index
    %35 = memref.load %arg0[%c3] : memref<8xi32, #tpu.memory_space<smem>>
    %c4 = arith.constant 4 : index
    %36 = memref.load %arg0[%c4] : memref<8xi32, #tpu.memory_space<smem>>
    %c20_i32_20 = arith.constant 20 : i32
    %37 = arith.cmpi sgt, %35, %c20_i32_20 : i32
    %c3_i32_21 = arith.constant 3 : i32
    %38 = arith.select %37, %c3_i32_21, %35 : i32
    %c20_i32_22 = arith.constant 20 : i32
    %39 = arith.cmpi sgt, %36, %c20_i32_22 : i32
    %c3_i32_23 = arith.constant 3 : i32
    %40 = arith.select %39, %c3_i32_23, %36 : i32
    %41 = arith.index_cast %38 : i32 to index
    %c0_24 = arith.constant 0 : index
    %42 = vector.load %arg1[%41, %c0_24] : memref<20x384xf32, #tpu.memory_space<vmem>>, vector<1x384xf32>
    %43 = arith.index_cast %40 : i32 to index
    %c0_25 = arith.constant 0 : index
    %44 = vector.load %arg2[%43, %c0_25] : memref<20x384xf32, #tpu.memory_space<vmem>>, vector<1x384xf32>
    %45 = arith.addf %42, %44 : vector<1x384xf32>
    %c4_26 = arith.constant 4 : index
    %46 = memref.load %arg0[%c4_26] : memref<8xi32, #tpu.memory_space<smem>>
    %c3_27 = arith.constant 3 : index
    %47 = memref.load %arg0[%c3_27] : memref<8xi32, #tpu.memory_space<smem>>
    %c20_i32_28 = arith.constant 20 : i32
    %48 = arith.cmpi sgt, %46, %c20_i32_28 : i32
    %c3_i32_29 = arith.constant 3 : i32
    %49 = arith.select %48, %c3_i32_29, %46 : i32
    %c20_i32_30 = arith.constant 20 : i32
    %50 = arith.cmpi sgt, %47, %c20_i32_30 : i32
    %c3_i32_31 = arith.constant 3 : i32
    %51 = arith.select %50, %c3_i32_31, %47 : i32
    %52 = arith.index_cast %49 : i32 to index
    %c0_32 = arith.constant 0 : index
    %53 = vector.load %arg1[%52, %c0_32] : memref<20x384xf32, #tpu.memory_space<vmem>>, vector<1x384xf32>
    %54 = arith.index_cast %51 : i32 to index
    %c0_33 = arith.constant 0 : index
    %55 = vector.load %arg2[%54, %c0_33] : memref<20x384xf32, #tpu.memory_space<vmem>>, vector<1x384xf32>
    %56 = arith.addf %53, %55 : vector<1x384xf32>
    %c5_34 = arith.constant 5 : index
    %57 = memref.load %arg0[%c5_34] : memref<8xi32, #tpu.memory_space<smem>>
    %c2_35 = arith.constant 2 : index
    %58 = memref.load %arg0[%c2_35] : memref<8xi32, #tpu.memory_space<smem>>
    %c20_i32_36 = arith.constant 20 : i32
    %59 = arith.cmpi sgt, %57, %c20_i32_36 : i32
    %c3_i32_37 = arith.constant 3 : i32
    %60 = arith.select %59, %c3_i32_37, %57 : i32
    %c20_i32_38 = arith.constant 20 : i32
    %61 = arith.cmpi sgt, %58, %c20_i32_38 : i32
    %c3_i32_39 = arith.constant 3 : i32
    %62 = arith.select %61, %c3_i32_39, %58 : i32
    %63 = arith.index_cast %60 : i32 to index
    %c0_40 = arith.constant 0 : index
    %64 = vector.load %arg1[%63, %c0_40] : memref<20x384xf32, #tpu.memory_space<vmem>>, vector<1x384xf32>
    %65 = arith.index_cast %62 : i32 to index
    %c0_41 = arith.constant 0 : index
    %66 = vector.load %arg2[%65, %c0_41] : memref<20x384xf32, #tpu.memory_space<vmem>>, vector<1x384xf32>
    %67 = arith.addf %64, %66 : vector<1x384xf32>
    %c6_42 = arith.constant 6 : index
    %68 = memref.load %arg0[%c6_42] : memref<8xi32, #tpu.memory_space<smem>>
    %c1_43 = arith.constant 1 : index
    %69 = memref.load %arg0[%c1_43] : memref<8xi32, #tpu.memory_space<smem>>
    %c20_i32_44 = arith.constant 20 : i32
    %70 = arith.cmpi sgt, %68, %c20_i32_44 : i32
    %c3_i32_45 = arith.constant 3 : i32
    %71 = arith.select %70, %c3_i32_45, %68 : i32
    %c20_i32_46 = arith.constant 20 : i32
    %72 = arith.cmpi sgt, %69, %c20_i32_46 : i32
    %c3_i32_47 = arith.constant 3 : i32
    %73 = arith.select %72, %c3_i32_47, %69 : i32
    %74 = arith.index_cast %71 : i32 to index
    %c0_48 = arith.constant 0 : index
    %75 = vector.load %arg1[%74, %c0_48] : memref<20x384xf32, #tpu.memory_space<vmem>>, vector<1x384xf32>
    %76 = arith.index_cast %73 : i32 to index
    %c0_49 = arith.constant 0 : index
    %77 = vector.load %arg2[%76, %c0_49] : memref<20x384xf32, #tpu.memory_space<vmem>>, vector<1x384xf32>
    %78 = arith.addf %75, %77 : vector<1x384xf32>
    %c7_50 = arith.constant 7 : index
    %79 = memref.load %arg0[%c7_50] : memref<8xi32, #tpu.memory_space<smem>>
    %c0_51 = arith.constant 0 : index
    %80 = memref.load %arg0[%c0_51] : memref<8xi32, #tpu.memory_space<smem>>
    %c20_i32_52 = arith.constant 20 : i32
    %81 = arith.cmpi sgt, %79, %c20_i32_52 : i32
    %c3_i32_53 = arith.constant 3 : i32
    %82 = arith.select %81, %c3_i32_53, %79 : i32
    %c20_i32_54 = arith.constant 20 : i32
    %83 = arith.cmpi sgt, %80, %c20_i32_54 : i32
    %c3_i32_55 = arith.constant 3 : i32
    %84 = arith.select %83, %c3_i32_55, %80 : i32
    %85 = arith.index_cast %82 : i32 to index
    %c0_56 = arith.constant 0 : index
    %86 = vector.load %arg1[%85, %c0_56] : memref<20x384xf32, #tpu.memory_space<vmem>>, vector<1x384xf32>
    %87 = arith.index_cast %84 : i32 to index
    %c0_57 = arith.constant 0 : index
    %88 = vector.load %arg2[%87, %c0_57] : memref<20x384xf32, #tpu.memory_space<vmem>>, vector<1x384xf32>
    %89 = arith.addf %86, %88 : vector<1x384xf32>
    %cst = arith.constant 0.000000e+00 : f32
    %90 = vector.broadcast %cst : f32 to vector<1x128xf32>
    %cst_58 = arith.constant dense<0.000000e+00> : vector<1x384xf32>
    %91 = tpu.matmul %90, %0, %cst_58 {dimension_numbers = #tpu.dot_dimension_numbers<[1], [0], [0], [1], [0, 0, 1, 1], [], []>} : vector<1x128xf32>, vector<128x384xf32>, vector<1x384xf32> -> vector<1x384xf32>
    %92 = vector.extract_strided_slice %12 {offsets = [0, 0], sizes = [1, 128], strides = [1, 1]} : vector<1x384xf32> to vector<1x128xf32>
    %93 = vector.extract_strided_slice %91 {offsets = [0, 0], sizes = [1, 128], strides = [1, 1]} : vector<1x384xf32> to vector<1x128xf32>
    %94 = arith.addf %92, %93 : vector<1x128xf32>
    %95 = arith.negf %94 : vector<1x128xf32>
    %96 = math.exp %95 : vector<1x128xf32>
    %cst_59 = arith.constant 1.000000e+00 : f32
    %97 = vector.broadcast %cst_59 : f32 to vector<1x128xf32>
    %98 = arith.addf %97, %96 : vector<1x128xf32>
    %99 = arith.divf %97, %98 : vector<1x128xf32>
    %100 = vector.extract_strided_slice %12 {offsets = [0, 128], sizes = [1, 128], strides = [1, 1]} : vector<1x384xf32> to vector<1x128xf32>
    %101 = vector.extract_strided_slice %91 {offsets = [0, 128], sizes = [1, 128], strides = [1, 1]} : vector<1x384xf32> to vector<1x128xf32>
    %102 = arith.addf %100, %101 : vector<1x128xf32>
    %103 = arith.negf %102 : vector<1x128xf32>
    %104 = math.exp %103 : vector<1x128xf32>
    %cst_60 = arith.constant 1.000000e+00 : f32
    %105 = vector.broadcast %cst_60 : f32 to vector<1x128xf32>
    %106 = arith.addf %105, %104 : vector<1x128xf32>
    %107 = arith.divf %105, %106 : vector<1x128xf32>
    %108 = vector.extract_strided_slice %12 {offsets = [0, 256], sizes = [1, 128], strides = [1, 1]} : vector<1x384xf32> to vector<1x128xf32>
    %109 = vector.extract_strided_slice %91 {offsets = [0, 256], sizes = [1, 128], strides = [1, 1]} : vector<1x384xf32> to vector<1x128xf32>
    %110 = arith.addf %109, %1 : vector<1x128xf32>
    %111 = arith.mulf %99, %110 : vector<1x128xf32>
    %112 = arith.addf %108, %111 : vector<1x128xf32>
    %113 = math.tanh %112 : vector<1x128xf32>
    %cst_61 = arith.constant 1.000000e+00 : f32
    %114 = vector.broadcast %cst_61 : f32 to vector<1x128xf32>
    %115 = arith.subf %114, %107 : vector<1x128xf32>
    %116 = arith.mulf %115, %113 : vector<1x128xf32>
    %117 = arith.mulf %107, %90 : vector<1x128xf32>
    %118 = arith.addf %116, %117 : vector<1x128xf32>
    %c0_62 = arith.constant 0 : index
    %c0_63 = arith.constant 0 : index
    %119 = vector.load %arg7[%c0_62, %c0_63] : memref<8x128xf32, #tpu.memory_space<vmem>>, vector<1x128xf32>
    tpu.vector_store %arg7[%c0_62, %c0_63], %118 {strides = array<i32>} : memref<8x128xf32, #tpu.memory_space<vmem>>, vector<1x128xf32>,
    %c7_64 = arith.constant 7 : index
    %c0_65 = arith.constant 0 : index
    %120 = vector.load %arg8[%c7_64, %c0_65] : memref<8x128xf32, #tpu.memory_space<vmem>>, vector<1x128xf32>
    tpu.vector_store %arg8[%c7_64, %c0_65], %118 {strides = array<i32>} : memref<8x128xf32, #tpu.memory_space<vmem>>, vector<1x128xf32>,
    %cst_66 = arith.constant dense<0.000000e+00> : vector<1x384xf32>
    %121 = tpu.matmul %118, %0, %cst_66 {dimension_numbers = #tpu.dot_dimension_numbers<[1], [0], [0], [1], [0, 0, 1, 1], [], []>} : vector<1x128xf32>, vector<128x384xf32>, vector<1x384xf32> -> vector<1x384xf32>
    %122 = vector.extract_strided_slice %23 {offsets = [0, 0], sizes = [1, 128], strides = [1, 1]} : vector<1x384xf32> to vector<1x128xf32>
    %123 = vector.extract_strided_slice %121 {offsets = [0, 0], sizes = [1, 128], strides = [1, 1]} : vector<1x384xf32> to vector<1x128xf32>
    %124 = arith.addf %122, %123 : vector<1x128xf32>
    %125 = arith.negf %124 : vector<1x128xf32>
    %126 = math.exp %125 : vector<1x128xf32>
    %cst_67 = arith.constant 1.000000e+00 : f32
    %127 = vector.broadcast %cst_67 : f32 to vector<1x128xf32>
    %128 = arith.addf %127, %126 : vector<1x128xf32>
    %129 = arith.divf %127, %128 : vector<1x128xf32>
    %130 = vector.extract_strided_slice %23 {offsets = [0, 128], sizes = [1, 128], strides = [1, 1]} : vector<1x384xf32> to vector<1x128xf32>
    %131 = vector.extract_strided_slice %121 {offsets = [0, 128], sizes = [1, 128], strides = [1, 1]} : vector<1x384xf32> to vector<1x128xf32>
    %132 = arith.addf %130, %131 : vector<1x128xf32>
    %133 = arith.negf %132 : vector<1x128xf32>
    %134 = math.exp %133 : vector<1x128xf32>
    %cst_68 = arith.constant 1.000000e+00 : f32
    %135 = vector.broadcast %cst_68 : f32 to vector<1x128xf32>
    %136 = arith.addf %135, %134 : vector<1x128xf32>
    %137 = arith.divf %135, %136 : vector<1x128xf32>
    %138 = vector.extract_strided_slice %23 {offsets = [0, 256], sizes = [1, 128], strides = [1, 1]} : vector<1x384xf32> to vector<1x128xf32>
    %139 = vector.extract_strided_slice %121 {offsets = [0, 256], sizes = [1, 128], strides = [1, 1]} : vector<1x384xf32> to vector<1x128xf32>
    %140 = arith.addf %139, %1 : vector<1x128xf32>
    %141 = arith.mulf %129, %140 : vector<1x128xf32>
    %142 = arith.addf %138, %141 : vector<1x128xf32>
    %143 = math.tanh %142 : vector<1x128xf32>
    %cst_69 = arith.constant 1.000000e+00 : f32
    %144 = vector.broadcast %cst_69 : f32 to vector<1x128xf32>
    %145 = arith.subf %144, %137 : vector<1x128xf32>
    %146 = arith.mulf %145, %143 : vector<1x128xf32>
    %147 = arith.mulf %137, %118 : vector<1x128xf32>
    %148 = arith.addf %146, %147 : vector<1x128xf32>
    %c1_70 = arith.constant 1 : index
    %c0_71 = arith.constant 0 : index
    %149 = vector.load %arg7[%c1_70, %c0_71] : memref<8x128xf32, #tpu.memory_space<vmem>>, vector<1x128xf32>
    tpu.vector_store %arg7[%c1_70, %c0_71], %148 {strides = array<i32>} : memref<8x128xf32, #tpu.memory_space<vmem>>, vector<1x128xf32>,
    %c6_72 = arith.constant 6 : index
    %c0_73 = arith.constant 0 : index
    %150 = vector.load %arg8[%c6_72, %c0_73] : memref<8x128xf32, #tpu.memory_space<vmem>>, vector<1x128xf32>
    tpu.vector_store %arg8[%c6_72, %c0_73], %148 {strides = array<i32>} : memref<8x128xf32, #tpu.memory_space<vmem>>, vector<1x128xf32>,
    %cst_74 = arith.constant dense<0.000000e+00> : vector<1x384xf32>
    %151 = tpu.matmul %148, %0, %cst_74 {dimension_numbers = #tpu.dot_dimension_numbers<[1], [0], [0], [1], [0, 0, 1, 1], [], []>} : vector<1x128xf32>, vector<128x384xf32>, vector<1x384xf32> -> vector<1x384xf32>
    %152 = vector.extract_strided_slice %34 {offsets = [0, 0], sizes = [1, 128], strides = [1, 1]} : vector<1x384xf32> to vector<1x128xf32>
    %153 = vector.extract_strided_slice %151 {offsets = [0, 0], sizes = [1, 128], strides = [1, 1]} : vector<1x384xf32> to vector<1x128xf32>
    %154 = arith.addf %152, %153 : vector<1x128xf32>
    %155 = arith.negf %154 : vector<1x128xf32>
    %156 = math.exp %155 : vector<1x128xf32>
    %cst_75 = arith.constant 1.000000e+00 : f32
    %157 = vector.broadcast %cst_75 : f32 to vector<1x128xf32>
    %158 = arith.addf %157, %156 : vector<1x128xf32>
    %159 = arith.divf %157, %158 : vector<1x128xf32>
    %160 = vector.extract_strided_slice %34 {offsets = [0, 128], sizes = [1, 128], strides = [1, 1]} : vector<1x384xf32> to vector<1x128xf32>
    %161 = vector.extract_strided_slice %151 {offsets = [0, 128], sizes = [1, 128], strides = [1, 1]} : vector<1x384xf32> to vector<1x128xf32>
    %162 = arith.addf %160, %161 : vector<1x128xf32>
    %163 = arith.negf %162 : vector<1x128xf32>
    %164 = math.exp %163 : vector<1x128xf32>
    %cst_76 = arith.constant 1.000000e+00 : f32
    %165 = vector.broadcast %cst_76 : f32 to vector<1x128xf32>
    %166 = arith.addf %165, %164 : vector<1x128xf32>
    %167 = arith.divf %165, %166 : vector<1x128xf32>
    %168 = vector.extract_strided_slice %34 {offsets = [0, 256], sizes = [1, 128], strides = [1, 1]} : vector<1x384xf32> to vector<1x128xf32>
    %169 = vector.extract_strided_slice %151 {offsets = [0, 256], sizes = [1, 128], strides = [1, 1]} : vector<1x384xf32> to vector<1x128xf32>
    %170 = arith.addf %169, %1 : vector<1x128xf32>
    %171 = arith.mulf %159, %170 : vector<1x128xf32>
    %172 = arith.addf %168, %171 : vector<1x128xf32>
    %173 = math.tanh %172 : vector<1x128xf32>
    %cst_77 = arith.constant 1.000000e+00 : f32
    %174 = vector.broadcast %cst_77 : f32 to vector<1x128xf32>
    %175 = arith.subf %174, %167 : vector<1x128xf32>
    %176 = arith.mulf %175, %173 : vector<1x128xf32>
    %177 = arith.mulf %167, %148 : vector<1x128xf32>
    %178 = arith.addf %176, %177 : vector<1x128xf32>
    %c2_78 = arith.constant 2 : index
    %c0_79 = arith.constant 0 : index
    %179 = vector.load %arg7[%c2_78, %c0_79] : memref<8x128xf32, #tpu.memory_space<vmem>>, vector<1x128xf32>
    tpu.vector_store %arg7[%c2_78, %c0_79], %178 {strides = array<i32>} : memref<8x128xf32, #tpu.memory_space<vmem>>, vector<1x128xf32>,
    %c5_80 = arith.constant 5 : index
    %c0_81 = arith.constant 0 : index
    %180 = vector.load %arg8[%c5_80, %c0_81] : memref<8x128xf32, #tpu.memory_space<vmem>>, vector<1x128xf32>
    tpu.vector_store %arg8[%c5_80, %c0_81], %178 {strides = array<i32>} : memref<8x128xf32, #tpu.memory_space<vmem>>, vector<1x128xf32>,
    %cst_82 = arith.constant dense<0.000000e+00> : vector<1x384xf32>
    %181 = tpu.matmul %178, %0, %cst_82 {dimension_numbers = #tpu.dot_dimension_numbers<[1], [0], [0], [1], [0, 0, 1, 1], [], []>} : vector<1x128xf32>, vector<128x384xf32>, vector<1x384xf32> -> vector<1x384xf32>
    %182 = vector.extract_strided_slice %45 {offsets = [0, 0], sizes = [1, 128], strides = [1, 1]} : vector<1x384xf32> to vector<1x128xf32>
    %183 = vector.extract_strided_slice %181 {offsets = [0, 0], sizes = [1, 128], strides = [1, 1]} : vector<1x384xf32> to vector<1x128xf32>
    %184 = arith.addf %182, %183 : vector<1x128xf32>
    %185 = arith.negf %184 : vector<1x128xf32>
    %186 = math.exp %185 : vector<1x128xf32>
    %cst_83 = arith.constant 1.000000e+00 : f32
    %187 = vector.broadcast %cst_83 : f32 to vector<1x128xf32>
    %188 = arith.addf %187, %186 : vector<1x128xf32>
    %189 = arith.divf %187, %188 : vector<1x128xf32>
    %190 = vector.extract_strided_slice %45 {offsets = [0, 128], sizes = [1, 128], strides = [1, 1]} : vector<1x384xf32> to vector<1x128xf32>
    %191 = vector.extract_strided_slice %181 {offsets = [0, 128], sizes = [1, 128], strides = [1, 1]} : vector<1x384xf32> to vector<1x128xf32>
    %192 = arith.addf %190, %191 : vector<1x128xf32>
    %193 = arith.negf %192 : vector<1x128xf32>
    %194 = math.exp %193 : vector<1x128xf32>
    %cst_84 = arith.constant 1.000000e+00 : f32
    %195 = vector.broadcast %cst_84 : f32 to vector<1x128xf32>
    %196 = arith.addf %195, %194 : vector<1x128xf32>
    %197 = arith.divf %195, %196 : vector<1x128xf32>
    %198 = vector.extract_strided_slice %45 {offsets = [0, 256], sizes = [1, 128], strides = [1, 1]} : vector<1x384xf32> to vector<1x128xf32>
    %199 = vector.extract_strided_slice %181 {offsets = [0, 256], sizes = [1, 128], strides = [1, 1]} : vector<1x384xf32> to vector<1x128xf32>
    %200 = arith.addf %199, %1 : vector<1x128xf32>
    %201 = arith.mulf %189, %200 : vector<1x128xf32>
    %202 = arith.addf %198, %201 : vector<1x128xf32>
    %203 = math.tanh %202 : vector<1x128xf32>
    %cst_85 = arith.constant 1.000000e+00 : f32
    %204 = vector.broadcast %cst_85 : f32 to vector<1x128xf32>
    %205 = arith.subf %204, %197 : vector<1x128xf32>
    %206 = arith.mulf %205, %203 : vector<1x128xf32>
    %207 = arith.mulf %197, %178 : vector<1x128xf32>
    %208 = arith.addf %206, %207 : vector<1x128xf32>
    %c3_86 = arith.constant 3 : index
    %c0_87 = arith.constant 0 : index
    %209 = vector.load %arg7[%c3_86, %c0_87] : memref<8x128xf32, #tpu.memory_space<vmem>>, vector<1x128xf32>
    tpu.vector_store %arg7[%c3_86, %c0_87], %208 {strides = array<i32>} : memref<8x128xf32, #tpu.memory_space<vmem>>, vector<1x128xf32>,
    %c4_88 = arith.constant 4 : index
    %c0_89 = arith.constant 0 : index
    %210 = vector.load %arg8[%c4_88, %c0_89] : memref<8x128xf32, #tpu.memory_space<vmem>>, vector<1x128xf32>
    tpu.vector_store %arg8[%c4_88, %c0_89], %208 {strides = array<i32>} : memref<8x128xf32, #tpu.memory_space<vmem>>, vector<1x128xf32>,
    %cst_90 = arith.constant dense<0.000000e+00> : vector<1x384xf32>
    %211 = tpu.matmul %208, %0, %cst_90 {dimension_numbers = #tpu.dot_dimension_numbers<[1], [0], [0], [1], [0, 0, 1, 1], [], []>} : vector<1x128xf32>, vector<128x384xf32>, vector<1x384xf32> -> vector<1x384xf32>
    %212 = vector.extract_strided_slice %56 {offsets = [0, 0], sizes = [1, 128], strides = [1, 1]} : vector<1x384xf32> to vector<1x128xf32>
    %213 = vector.extract_strided_slice %211 {offsets = [0, 0], sizes = [1, 128], strides = [1, 1]} : vector<1x384xf32> to vector<1x128xf32>
    %214 = arith.addf %212, %213 : vector<1x128xf32>
    %215 = arith.negf %214 : vector<1x128xf32>
    %216 = math.exp %215 : vector<1x128xf32>
    %cst_91 = arith.constant 1.000000e+00 : f32
    %217 = vector.broadcast %cst_91 : f32 to vector<1x128xf32>
    %218 = arith.addf %217, %216 : vector<1x128xf32>
    %219 = arith.divf %217, %218 : vector<1x128xf32>
    %220 = vector.extract_strided_slice %56 {offsets = [0, 128], sizes = [1, 128], strides = [1, 1]} : vector<1x384xf32> to vector<1x128xf32>
    %221 = vector.extract_strided_slice %211 {offsets = [0, 128], sizes = [1, 128], strides = [1, 1]} : vector<1x384xf32> to vector<1x128xf32>
    %222 = arith.addf %220, %221 : vector<1x128xf32>
    %223 = arith.negf %222 : vector<1x128xf32>
    %224 = math.exp %223 : vector<1x128xf32>
    %cst_92 = arith.constant 1.000000e+00 : f32
    %225 = vector.broadcast %cst_92 : f32 to vector<1x128xf32>
    %226 = arith.addf %225, %224 : vector<1x128xf32>
    %227 = arith.divf %225, %226 : vector<1x128xf32>
    %228 = vector.extract_strided_slice %56 {offsets = [0, 256], sizes = [1, 128], strides = [1, 1]} : vector<1x384xf32> to vector<1x128xf32>
    %229 = vector.extract_strided_slice %211 {offsets = [0, 256], sizes = [1, 128], strides = [1, 1]} : vector<1x384xf32> to vector<1x128xf32>
    %230 = arith.addf %229, %1 : vector<1x128xf32>
    %231 = arith.mulf %219, %230 : vector<1x128xf32>
    %232 = arith.addf %228, %231 : vector<1x128xf32>
    %233 = math.tanh %232 : vector<1x128xf32>
    %cst_93 = arith.constant 1.000000e+00 : f32
    %234 = vector.broadcast %cst_93 : f32 to vector<1x128xf32>
    %235 = arith.subf %234, %227 : vector<1x128xf32>
    %236 = arith.mulf %235, %233 : vector<1x128xf32>
    %237 = arith.mulf %227, %208 : vector<1x128xf32>
    %238 = arith.addf %236, %237 : vector<1x128xf32>
    %c4_94 = arith.constant 4 : index
    %c0_95 = arith.constant 0 : index
    %239 = vector.load %arg7[%c4_94, %c0_95] : memref<8x128xf32, #tpu.memory_space<vmem>>, vector<1x128xf32>
    tpu.vector_store %arg7[%c4_94, %c0_95], %238 {strides = array<i32>} : memref<8x128xf32, #tpu.memory_space<vmem>>, vector<1x128xf32>,
    %c3_96 = arith.constant 3 : index
    %c0_97 = arith.constant 0 : index
    %240 = vector.load %arg8[%c3_96, %c0_97] : memref<8x128xf32, #tpu.memory_space<vmem>>, vector<1x128xf32>
    tpu.vector_store %arg8[%c3_96, %c0_97], %238 {strides = array<i32>} : memref<8x128xf32, #tpu.memory_space<vmem>>, vector<1x128xf32>,
    %cst_98 = arith.constant dense<0.000000e+00> : vector<1x384xf32>
    %241 = tpu.matmul %238, %0, %cst_98 {dimension_numbers = #tpu.dot_dimension_numbers<[1], [0], [0], [1], [0, 0, 1, 1], [], []>} : vector<1x128xf32>, vector<128x384xf32>, vector<1x384xf32> -> vector<1x384xf32>
    %242 = vector.extract_strided_slice %67 {offsets = [0, 0], sizes = [1, 128], strides = [1, 1]} : vector<1x384xf32> to vector<1x128xf32>
    %243 = vector.extract_strided_slice %241 {offsets = [0, 0], sizes = [1, 128], strides = [1, 1]} : vector<1x384xf32> to vector<1x128xf32>
    %244 = arith.addf %242, %243 : vector<1x128xf32>
    %245 = arith.negf %244 : vector<1x128xf32>
    %246 = math.exp %245 : vector<1x128xf32>
    %cst_99 = arith.constant 1.000000e+00 : f32
    %247 = vector.broadcast %cst_99 : f32 to vector<1x128xf32>
    %248 = arith.addf %247, %246 : vector<1x128xf32>
    %249 = arith.divf %247, %248 : vector<1x128xf32>
    %250 = vector.extract_strided_slice %67 {offsets = [0, 128], sizes = [1, 128], strides = [1, 1]} : vector<1x384xf32> to vector<1x128xf32>
    %251 = vector.extract_strided_slice %241 {offsets = [0, 128], sizes = [1, 128], strides = [1, 1]} : vector<1x384xf32> to vector<1x128xf32>
    %252 = arith.addf %250, %251 : vector<1x128xf32>
    %253 = arith.negf %252 : vector<1x128xf32>
    %254 = math.exp %253 : vector<1x128xf32>
    %cst_100 = arith.constant 1.000000e+00 : f32
    %255 = vector.broadcast %cst_100 : f32 to vector<1x128xf32>
    %256 = arith.addf %255, %254 : vector<1x128xf32>
    %257 = arith.divf %255, %256 : vector<1x128xf32>
    %258 = vector.extract_strided_slice %67 {offsets = [0, 256], sizes = [1, 128], strides = [1, 1]} : vector<1x384xf32> to vector<1x128xf32>
    %259 = vector.extract_strided_slice %241 {offsets = [0, 256], sizes = [1, 128], strides = [1, 1]} : vector<1x384xf32> to vector<1x128xf32>
    %260 = arith.addf %259, %1 : vector<1x128xf32>
    %261 = arith.mulf %249, %260 : vector<1x128xf32>
    %262 = arith.addf %258, %261 : vector<1x128xf32>
    %263 = math.tanh %262 : vector<1x128xf32>
    %cst_101 = arith.constant 1.000000e+00 : f32
    %264 = vector.broadcast %cst_101 : f32 to vector<1x128xf32>
    %265 = arith.subf %264, %257 : vector<1x128xf32>
    %266 = arith.mulf %265, %263 : vector<1x128xf32>
    %267 = arith.mulf %257, %238 : vector<1x128xf32>
    %268 = arith.addf %266, %267 : vector<1x128xf32>
    %c5_102 = arith.constant 5 : index
    %c0_103 = arith.constant 0 : index
    %269 = vector.load %arg7[%c5_102, %c0_103] : memref<8x128xf32, #tpu.memory_space<vmem>>, vector<1x128xf32>
    tpu.vector_store %arg7[%c5_102, %c0_103], %268 {strides = array<i32>} : memref<8x128xf32, #tpu.memory_space<vmem>>, vector<1x128xf32>,
    %c2_104 = arith.constant 2 : index
    %c0_105 = arith.constant 0 : index
    %270 = vector.load %arg8[%c2_104, %c0_105] : memref<8x128xf32, #tpu.memory_space<vmem>>, vector<1x128xf32>
    tpu.vector_store %arg8[%c2_104, %c0_105], %268 {strides = array<i32>} : memref<8x128xf32, #tpu.memory_space<vmem>>, vector<1x128xf32>,
    %cst_106 = arith.constant dense<0.000000e+00> : vector<1x384xf32>
    %271 = tpu.matmul %268, %0, %cst_106 {dimension_numbers = #tpu.dot_dimension_numbers<[1], [0], [0], [1], [0, 0, 1, 1], [], []>} : vector<1x128xf32>, vector<128x384xf32>, vector<1x384xf32> -> vector<1x384xf32>
    %272 = vector.extract_strided_slice %78 {offsets = [0, 0], sizes = [1, 128], strides = [1, 1]} : vector<1x384xf32> to vector<1x128xf32>
    %273 = vector.extract_strided_slice %271 {offsets = [0, 0], sizes = [1, 128], strides = [1, 1]} : vector<1x384xf32> to vector<1x128xf32>
    %274 = arith.addf %272, %273 : vector<1x128xf32>
    %275 = arith.negf %274 : vector<1x128xf32>
    %276 = math.exp %275 : vector<1x128xf32>
    %cst_107 = arith.constant 1.000000e+00 : f32
    %277 = vector.broadcast %cst_107 : f32 to vector<1x128xf32>
    %278 = arith.addf %277, %276 : vector<1x128xf32>
    %279 = arith.divf %277, %278 : vector<1x128xf32>
    %280 = vector.extract_strided_slice %78 {offsets = [0, 128], sizes = [1, 128], strides = [1, 1]} : vector<1x384xf32> to vector<1x128xf32>
    %281 = vector.extract_strided_slice %271 {offsets = [0, 128], sizes = [1, 128], strides = [1, 1]} : vector<1x384xf32> to vector<1x128xf32>
    %282 = arith.addf %280, %281 : vector<1x128xf32>
    %283 = arith.negf %282 : vector<1x128xf32>
    %284 = math.exp %283 : vector<1x128xf32>
    %cst_108 = arith.constant 1.000000e+00 : f32
    %285 = vector.broadcast %cst_108 : f32 to vector<1x128xf32>
    %286 = arith.addf %285, %284 : vector<1x128xf32>
    %287 = arith.divf %285, %286 : vector<1x128xf32>
    %288 = vector.extract_strided_slice %78 {offsets = [0, 256], sizes = [1, 128], strides = [1, 1]} : vector<1x384xf32> to vector<1x128xf32>
    %289 = vector.extract_strided_slice %271 {offsets = [0, 256], sizes = [1, 128], strides = [1, 1]} : vector<1x384xf32> to vector<1x128xf32>
    %290 = arith.addf %289, %1 : vector<1x128xf32>
    %291 = arith.mulf %279, %290 : vector<1x128xf32>
    %292 = arith.addf %288, %291 : vector<1x128xf32>
    %293 = math.tanh %292 : vector<1x128xf32>
    %cst_109 = arith.constant 1.000000e+00 : f32
    %294 = vector.broadcast %cst_109 : f32 to vector<1x128xf32>
    %295 = arith.subf %294, %287 : vector<1x128xf32>
    %296 = arith.mulf %295, %293 : vector<1x128xf32>
    %297 = arith.mulf %287, %268 : vector<1x128xf32>
    %298 = arith.addf %296, %297 : vector<1x128xf32>
    %c6_110 = arith.constant 6 : index
    %c0_111 = arith.constant 0 : index
    %299 = vector.load %arg7[%c6_110, %c0_111] : memref<8x128xf32, #tpu.memory_space<vmem>>, vector<1x128xf32>
    tpu.vector_store %arg7[%c6_110, %c0_111], %298 {strides = array<i32>} : memref<8x128xf32, #tpu.memory_space<vmem>>, vector<1x128xf32>,
    %c1_112 = arith.constant 1 : index
    %c0_113 = arith.constant 0 : index
    %300 = vector.load %arg8[%c1_112, %c0_113] : memref<8x128xf32, #tpu.memory_space<vmem>>, vector<1x128xf32>
    tpu.vector_store %arg8[%c1_112, %c0_113], %298 {strides = array<i32>} : memref<8x128xf32, #tpu.memory_space<vmem>>, vector<1x128xf32>,
    %cst_114 = arith.constant dense<0.000000e+00> : vector<1x384xf32>
    %301 = tpu.matmul %298, %0, %cst_114 {dimension_numbers = #tpu.dot_dimension_numbers<[1], [0], [0], [1], [0, 0, 1, 1], [], []>} : vector<1x128xf32>, vector<128x384xf32>, vector<1x384xf32> -> vector<1x384xf32>
    %302 = vector.extract_strided_slice %89 {offsets = [0, 0], sizes = [1, 128], strides = [1, 1]} : vector<1x384xf32> to vector<1x128xf32>
    %303 = vector.extract_strided_slice %301 {offsets = [0, 0], sizes = [1, 128], strides = [1, 1]} : vector<1x384xf32> to vector<1x128xf32>
    %304 = arith.addf %302, %303 : vector<1x128xf32>
    %305 = arith.negf %304 : vector<1x128xf32>
    %306 = math.exp %305 : vector<1x128xf32>
    %cst_115 = arith.constant 1.000000e+00 : f32
    %307 = vector.broadcast %cst_115 : f32 to vector<1x128xf32>
    %308 = arith.addf %307, %306 : vector<1x128xf32>
    %309 = arith.divf %307, %308 : vector<1x128xf32>
    %310 = vector.extract_strided_slice %89 {offsets = [0, 128], sizes = [1, 128], strides = [1, 1]} : vector<1x384xf32> to vector<1x128xf32>
    %311 = vector.extract_strided_slice %301 {offsets = [0, 128], sizes = [1, 128], strides = [1, 1]} : vector<1x384xf32> to vector<1x128xf32>
    %312 = arith.addf %310, %311 : vector<1x128xf32>
    %313 = arith.negf %312 : vector<1x128xf32>
    %314 = math.exp %313 : vector<1x128xf32>
    %cst_116 = arith.constant 1.000000e+00 : f32
    %315 = vector.broadcast %cst_116 : f32 to vector<1x128xf32>
    %316 = arith.addf %315, %314 : vector<1x128xf32>
    %317 = arith.divf %315, %316 : vector<1x128xf32>
    %318 = vector.extract_strided_slice %89 {offsets = [0, 256], sizes = [1, 128], strides = [1, 1]} : vector<1x384xf32> to vector<1x128xf32>
    %319 = vector.extract_strided_slice %301 {offsets = [0, 256], sizes = [1, 128], strides = [1, 1]} : vector<1x384xf32> to vector<1x128xf32>
    %320 = arith.addf %319, %1 : vector<1x128xf32>
    %321 = arith.mulf %309, %320 : vector<1x128xf32>
    %322 = arith.addf %318, %321 : vector<1x128xf32>
    %323 = math.tanh %322 : vector<1x128xf32>
    %cst_117 = arith.constant 1.000000e+00 : f32
    %324 = vector.broadcast %cst_117 : f32 to vector<1x128xf32>
    %325 = arith.subf %324, %317 : vector<1x128xf32>
    %326 = arith.mulf %325, %323 : vector<1x128xf32>
    %327 = arith.mulf %317, %298 : vector<1x128xf32>
    %328 = arith.addf %326, %327 : vector<1x128xf32>
    %c7_118 = arith.constant 7 : index
    %c0_119 = arith.constant 0 : index
    %329 = vector.load %arg7[%c7_118, %c0_119] : memref<8x128xf32, #tpu.memory_space<vmem>>, vector<1x128xf32>
    tpu.vector_store %arg7[%c7_118, %c0_119], %328 {strides = array<i32>} : memref<8x128xf32, #tpu.memory_space<vmem>>, vector<1x128xf32>,
    %c0_120 = arith.constant 0 : index
    %c0_121 = arith.constant 0 : index
    %330 = vector.load %arg8[%c0_120, %c0_121] : memref<8x128xf32, #tpu.memory_space<vmem>>, vector<1x128xf32>
    tpu.vector_store %arg8[%c0_120, %c0_121], %328 {strides = array<i32>} : memref<8x128xf32, #tpu.memory_space<vmem>>, vector<1x128xf32>,
    %c0_122 = arith.constant 0 : index
    %c0_123 = arith.constant 0 : index
    %331 = vector.load %arg7[%c0_122, %c0_123] : memref<8x128xf32, #tpu.memory_space<vmem>>, vector<8x15xf32>
    %c0_124 = arith.constant 0 : index
    %c0_125 = arith.constant 0 : index
    %332 = vector.load %arg5[%c0_124, %c0_125] : memref<8x30xf32, #tpu.memory_space<vmem>>, vector<8x15xf32>
    tpu.vector_store %arg5[%c0_124, %c0_125], %331 {strides = array<i32>} : memref<8x30xf32, #tpu.memory_space<vmem>>, vector<8x15xf32>,
    %c0_126 = arith.constant 0 : index
    %c15 = arith.constant 15 : index
    %333 = vector.load %arg8[%c0_126, %c15] : memref<8x128xf32, #tpu.memory_space<vmem>>, vector<8x15xf32>
    %c0_127 = arith.constant 0 : index
    %c15_128 = arith.constant 15 : index
    %334 = vector.load %arg5[%c0_127, %c15_128] : memref<8x30xf32, #tpu.memory_space<vmem>>, vector<8x15xf32>
    tpu.vector_store %arg5[%c0_127, %c15_128], %333 {strides = array<i32>} : memref<8x30xf32, #tpu.memory_space<vmem>>, vector<8x15xf32>,
    %335 = vector.extract_strided_slice %328 {offsets = [0, 0], sizes = [1, 15], strides = [1, 1]} : vector<1x128xf32> to vector<1x15xf32>
    %c0_129 = arith.constant 0 : index
    %c0_130 = arith.constant 0 : index
    %336 = vector.load %arg6[%c0_129, %c0_130] : memref<2x15xf32, #tpu.memory_space<vmem>>, vector<1x15xf32>
    tpu.vector_store %arg6[%c0_129, %c0_130], %335 {strides = array<i32>} : memref<2x15xf32, #tpu.memory_space<vmem>>, vector<1x15xf32>,
    %337 = vector.extract_strided_slice %328 {offsets = [0, 15], sizes = [1, 15], strides = [1, 1]} : vector<1x128xf32> to vector<1x15xf32>
    %c1_131 = arith.constant 1 : index
    %c0_132 = arith.constant 0 : index
    %338 = vector.load %arg6[%c1_131, %c0_132] : memref<2x15xf32, #tpu.memory_space<vmem>>, vector<1x15xf32>
    tpu.vector_store %arg6[%c1_131, %c0_132], %337 {strides = array<i32>} : memref<2x15xf32, #tpu.memory_space<vmem>>, vector<1x15xf32>,
    return
  }
}

</mosaic_0001>

<llo_original>
// kernel: _lambda_.1
$region0: #{_lambda_.1}
  #allocation0 [shape = 'u32[]', space=smem, size = 0x4, offset = 0x4, fixed_abs, tag = 'smem constant byte address 0x4 - core index']
  #allocation1 [shape = 'u32[144,128]{1,0:T(1,128)}', space=vmem, size = 0x12000, scoped, tag = 'internal scratch']
  #allocation2 [shape = 'f32[8,128]{1,0:T(8,128)}', space=vmem, size = 0x1000, scoped, tag = 'scratch operand']
  #allocation3 [shape = 'f32[8,128]{1,0:T(8,128)}', space=vmem, size = 0x1000, scoped, tag = 'scratch operand']
  %s0 = inlined_call_operand.hbm [shape: s32[8], index: 0, kind: input, shape index: {}]
  %s1 = inlined_call_operand.hbm [shape: f32[20,384], index: 1, kind: input, shape index: {}]
  %s2 = inlined_call_operand.hbm [shape: f32[20,384], index: 2, kind: input, shape index: {}]
  %s3 = inlined_call_operand.hbm [shape: f32[128,384], index: 3, kind: input, shape index: {}]
  %s4 = inlined_call_operand.vmem [shape: f32[1,128], index: 4, kind: input, shape index: {}]
  %s5 = inlined_call_operand.hbm [shape: f32[8,30], index: 5, kind: output, shape index: {0}]
  %s6 = inlined_call_operand.hbm [shape: f32[2,15], index: 6, kind: output, shape index: {1}]
  %7 = xla_tuple %s5, %s6
  %s8 = sld [smem:[#allocation0]]
  $region54: #{_lambda_.1} parent=0
    _
  %s10 = ssub.s32 1, %s8
  %s11 = scalar_select 0, %s10, %s8
  $region1: #{_lambda_.1} parent=0
    #allocation4 [shape = 'u8[512]{0}', space=smem, size = 0x200, scoped, tag = 'input window, operand 0, single buffered']
    #allocation5 [shape = 's32[1]{0}', space=sflag, size = 0x4, scoped, tag = 'scoped memory for _lambda_.1']
    #allocation6 [shape = 's32[1]{0}', space=sflag, size = 0x4, scoped, tag = 'scoped memory for _lambda_.1']
    #allocation7 [shape = 's32[1]{0}', space=sflag, size = 0x4, scoped, tag = 'scoped memory for _lambda_.1']
    #allocation8 [shape = 'u8[36864]{0}', space=vmem, size = 0x9000, scoped, tag = 'input window, operand 1, single buffered']
    #allocation9 [shape = 'u8[36864]{0}', space=vmem, size = 0x9000, scoped, tag = 'input window, operand 2, single buffered']
    #allocation10 [shape = 's32[1]{0}', space=sflag, size = 0x4, scoped, tag = 'scoped memory for _lambda_.1']
    #allocation11 [shape = 'u8[196608]{0}', space=vmem, size = 0x30000, scoped, tag = 'input window, operand 3, single buffered']
    #allocation12 [shape = 'u8[4096]{0}', space=vmem, size = 0x1000, scoped, tag = 'output window, operand 0, single buffered']
    #allocation13 [shape = 'u8[1024]{0}', space=vmem, size = 0x400, scoped, tag = 'output window, operand 1, single buffered']
    #allocation14 [shape = 's32[1]{0}', space=sflag, size = 0x4, scoped, tag = 'scoped memory for _lambda_.1']
    %12 = vsyncpa [#allocation7], 0
    %13 = vsyncpa [#allocation5], 0
    %14 = vsyncpa [#allocation10], 0
    %15 = vsyncpa [#allocation6], 0
    %16 = vsyncpa [#allocation14], 0
    // Predicated region
    $region2: #{_lambda_.1} parent=1 // pred_check
      _
    $region3: #{_lambda_.1} parent=1 // pred_check_branch
      %18 = sbr.rel (0) target = $region5
    $region4: #{_lambda_.1} parent=1 // pred_region
      %s20 = ssub.s32 16, 16
      %21 = vsyncadd [#allocation7], %s20
      %24 = dma.hbm_to_smem %s0, 16, [#allocation4], [#allocation7]
    $region5: #{_lambda_.1} parent=1 // pred_fallthru
      _
    // Predicated region
    $region6: #{_lambda_.1} parent=1 // pred_check
      _
    $region7: #{_lambda_.1} parent=1 // pred_check_branch
      %26 = sbr.rel (0) target = $region9
    $region8: #{_lambda_.1} parent=1 // pred_region
      %s28 = ssub.s32 1152, 1152
      %29 = vsyncadd [#allocation5], %s28
      %s30 = sshll.u32 [#allocation8], 4
      %s31 = int_to_ptr.vmem [resolvable:$true] %s30
      %36 = dma.hbm_to_vmem [thread:$0]  %s1, 1152, %s31, [#allocation5], 384, 384, 24
    $region9: #{_lambda_.1} parent=1 // pred_fallthru
      _
    // Predicated region
    $region10: #{_lambda_.1} parent=1 // pred_check
      _
    $region11: #{_lambda_.1} parent=1 // pred_check_branch
      %38 = sbr.rel (0) target = $region13
    $region12: #{_lambda_.1} parent=1 // pred_region
      %s40 = ssub.s32 1152, 1152
      %41 = vsyncadd [#allocation10], %s40
      %s42 = sshll.u32 [#allocation9], 4
      %s43 = int_to_ptr.vmem [resolvable:$true] %s42
      %48 = dma.hbm_to_vmem [thread:$0]  %s2, 1152, %s43, [#allocation10], 384, 384, 24
    $region13: #{_lambda_.1} parent=1 // pred_fallthru
      _
    // Predicated region
    $region14: #{_lambda_.1} parent=1 // pred_check
      _
    $region15: #{_lambda_.1} parent=1 // pred_check_branch
      %50 = sbr.rel (0) target = $region17
    $region16: #{_lambda_.1} parent=1 // pred_region
      %s52 = ssub.s32 6144, 6144
      %53 = vsyncadd [#allocation10], %s52
      %s54 = sshll.u32 [#allocation11], 4
      %s55 = int_to_ptr.vmem [resolvable:$true] %s54
      %60 = dma.hbm_to_vmem [thread:$0]  %s3, 6144, %s55, [#allocation10], 384, 384, 24
    $region17: #{_lambda_.1} parent=1 // pred_fallthru
      _
    // Predicated region
    $region18: #{_lambda_.1} parent=1 // pred_check
      _
    $region19: #{_lambda_.1} parent=1 // pred_check_branch
      %62 = sbr.rel (0) target = $region21
    $region20: #{_lambda_.1} parent=1 // pred_region
      _
    $region21: #{_lambda_.1} parent=1 // pred_fallthru
      _
    // Predicated region
    $region22: #{_lambda_.1} parent=1 // pred_check
      _
    $region23: #{_lambda_.1} parent=1 // pred_check_branch
      %64 = sbr.rel (0) target = $region25
    $region24: #{_lambda_.1} parent=1 // pred_region
      %65 = dma.done [#allocation7], 16
    $region25: #{_lambda_.1} parent=1 // pred_fallthru
      _
    // Predicated region
    $region26: #{_lambda_.1} parent=1 // pred_check
      _
    $region27: #{_lambda_.1} parent=1 // pred_check_branch
      %67 = sbr.rel (0) target = $region29
    $region28: #{_lambda_.1} parent=1 // pred_region
      %68 = dma.done [#allocation5], 1152
    $region29: #{_lambda_.1} parent=1 // pred_fallthru
      _
    // Predicated region
    $region30: #{_lambda_.1} parent=1 // pred_check
      _
    $region31: #{_lambda_.1} parent=1 // pred_check_branch
      %70 = sbr.rel (0) target = $region33
    $region32: #{_lambda_.1} parent=1 // pred_region
      %71 = dma.done [#allocation10], 1152
    $region33: #{_lambda_.1} parent=1 // pred_fallthru
      _
    // Predicated region
    $region34: #{_lambda_.1} parent=1 // pred_check
      _
    $region35: #{_lambda_.1} parent=1 // pred_check_branch
      %73 = sbr.rel (0) target = $region37
    $region36: #{_lambda_.1} parent=1 // pred_region
      %74 = dma.done [#allocation10], 6144
    $region37: #{_lambda_.1} parent=1 // pred_fallthru
      _
    %75 = sfence
    %v76 = vld [vmem:[#allocation11] sm:$0xff]
    %v77 = vld [vmem:[#allocation11 + $0x8] sm:$0xff]
    %v78 = vld [vmem:[#allocation11 + $0x10] sm:$0xff]
    %v79 = vld [vmem:[#allocation11 + $0x18] sm:$0xff]
    %v80 = vld [vmem:[#allocation11 + $0x20] sm:$0xff]
    %v81 = vld [vmem:[#allocation11 + $0x28] sm:$0xff]
    %v82 = vld [vmem:[#allocation11 + $0x30] sm:$0xff]
    %v83 = vld [vmem:[#allocation11 + $0x38] sm:$0xff]
    %v84 = vld [vmem:[#allocation11 + $0x40] sm:$0xff]
    %v85 = vld [vmem:[#allocation11 + $0x48] sm:$0xff]
    %v86 = vld [vmem:[#allocation11 + $0x50] sm:$0xff]
    %v87 = vld [vmem:[#allocation11 + $0x58] sm:$0xff]
    %v88 = vld [vmem:[#allocation11 + $0x60] sm:$0xff]
    %v89 = vld [vmem:[#allocation11 + $0x68] sm:$0xff]
    %v90 = vld [vmem:[#allocation11 + $0x70] sm:$0xff]
    %v91 = vld [vmem:[#allocation11 + $0x78] sm:$0xff]
    %v92 = vld [vmem:[#allocation11 + $0x80] sm:$0xff]
    %v93 = vld [vmem:[#allocation11 + $0x88] sm:$0xff]
    %v94 = vld [vmem:[#allocation11 + $0x90] sm:$0xff]
    %v95 = vld [vmem:[#allocation11 + $0x98] sm:$0xff]
    %v96 = vld [vmem:[#allocation11 + $0xa0] sm:$0xff]
    %v97 = vld [vmem:[#allocation11 + $0xa8] sm:$0xff]
    %v98 = vld [vmem:[#allocation11 + $0xb0] sm:$0xff]
    %v99 = vld [vmem:[#allocation11 + $0xb8] sm:$0xff]
    %v100 = vld [vmem:[#allocation11 + $0xc0] sm:$0xff]
    %v101 = vld [vmem:[#allocation11 + $0xc8] sm:$0xff]
    %v102 = vld [vmem:[#allocation11 + $0xd0] sm:$0xff]
    %v103 = vld [vmem:[#allocation11 + $0xd8] sm:$0xff]
    %v104 = vld [vmem:[#allocation11 + $0xe0] sm:$0xff]
    %v105 = vld [vmem:[#allocation11 + $0xe8] sm:$0xff]
    %v106 = vld [vmem:[#allocation11 + $0xf0] sm:$0xff]
    %v107 = vld [vmem:[#allocation11 + $0xf8] sm:$0xff]
    %v108 = vld [vmem:[#allocation11 + $0x100] sm:$0xff]
    %v109 = vld [vmem:[#allocation11 + $0x108] sm:$0xff]
    %v110 = vld [vmem:[#allocation11 + $0x110] sm:$0xff]
    %v111 = vld [vmem:[#allocation11 + $0x118] sm:$0xff]
    %v112 = vld [vmem:[#allocation11 + $0x120] sm:$0xff]
    %v113 = vld [vmem:[#allocation11 + $0x128] sm:$0xff]
    %v114 = vld [vmem:[#allocation11 + $0x130] sm:$0xff]
    %v115 = vld [vmem:[#allocation11 + $0x138] sm:$0xff]
    %v116 = vld [vmem:[#allocation11 + $0x140] sm:$0xff]
    %v117 = vld [vmem:[#allocation11 + $0x148] sm:$0xff]
    %v118 = vld [vmem:[#allocation11 + $0x150] sm:$0xff]
    %v119 = vld [vmem:[#allocation11 + $0x158] sm:$0xff]
    %v120 = vld [vmem:[#allocation11 + $0x160] sm:$0xff]
    %v121 = vld [vmem:[#allocation11 + $0x168] sm:$0xff]
    %v122 = vld [vmem:[#allocation11 + $0x170] sm:$0xff]
    %v123 = vld [vmem:[#allocation11 + $0x178] sm:$0xff]
    %v124 = vld [vmem:[%s4] sm:$0x1]
    %s125 = sld [smem:[#allocation4]]
    %s126 = sld [smem:[#allocation4 + $0x7]]
    %p127 = scmp.gt.s32.totalorder %s125, 20
    %s128 = scalar_select %p127, 3, %s125
    %p129 = scmp.gt.s32.totalorder %s126, 20
    %s130 = scalar_select %p129, 3, %s126
    %s131 = sshra.s32 %s128, 3
    %s132 = sand.u32 %s128, 7
    %s133 = sshra.s32 %s128, 3
    %s134 = sand.u32 %s128, 7
    %s135 = smul.u32 %s131, 3
    %s136 = smul.u32 %s135, 8
    %s137 = sadd.s32 %s136, %s134
    %s138 = scalar_lea.vmem [#allocation8], %s137
    %v139 = vld [vmem:[%s138] ss:$8 sm:$0x7]
    %s140 = sshra.s32 %s130, 3
    %s141 = sand.u32 %s130, 7
    %s142 = sshra.s32 %s130, 3
    %s143 = sand.u32 %s130, 7
    %s144 = smul.u32 %s140, 3
    %s145 = smul.u32 %s144, 8
    %s146 = sadd.s32 %s145, %s143
    %s147 = scalar_lea.vmem [#allocation9], %s146
    %v148 = vld [vmem:[%s147] ss:$8 sm:$0x7]
    %v149 = vadd.f32 %v139, %v148
    %s150 = sld [smem:[#allocation4 + $0x1]]
    %s151 = sld [smem:[#allocation4 + $0x6]]
    %p152 = scmp.gt.s32.totalorder %s150, 20
    %s153 = scalar_select %p152, 3, %s150
    %p154 = scmp.gt.s32.totalorder %s151, 20
    %s155 = scalar_select %p154, 3, %s151
    %s156 = sshra.s32 %s153, 3
    %s157 = sand.u32 %s153, 7
    %s158 = sshra.s32 %s153, 3
    %s159 = sand.u32 %s153, 7
    %s160 = smul.u32 %s156, 3
    %s161 = smul.u32 %s160, 8
    %s162 = sadd.s32 %s161, %s159
    %s163 = scalar_lea.vmem [#allocation8], %s162
    %v164 = vld [vmem:[%s163] ss:$8 sm:$0x7]
    %s165 = sshra.s32 %s155, 3
    %s166 = sand.u32 %s155, 7
    %s167 = sshra.s32 %s155, 3
    %s168 = sand.u32 %s155, 7
    %s169 = smul.u32 %s165, 3
    %s170 = smul.u32 %s169, 8
    %s171 = sadd.s32 %s170, %s168
    %s172 = scalar_lea.vmem [#allocation9], %s171
    %v173 = vld [vmem:[%s172] ss:$8 sm:$0x7]
    %v174 = vadd.f32 %v164, %v173
    %s175 = sld [smem:[#allocation4 + $0x2]]
    %s176 = sld [smem:[#allocation4 + $0x5]]
    %p177 = scmp.gt.s32.totalorder %s175, 20
    %s178 = scalar_select %p177, 3, %s175
    %p179 = scmp.gt.s32.totalorder %s176, 20
    %s180 = scalar_select %p179, 3, %s176
    %s181 = sshra.s32 %s178, 3
    %s182 = sand.u32 %s178, 7
    %s183 = sshra.s32 %s178, 3
    %s184 = sand.u32 %s178, 7
    %s185 = smul.u32 %s181, 3
    %s186 = smul.u32 %s185, 8
    %s187 = sadd.s32 %s186, %s184
    %s188 = scalar_lea.vmem [#allocation8], %s187
    %v189 = vld [vmem:[%s188] ss:$8 sm:$0x7]
    %s190 = sshra.s32 %s180, 3
    %s191 = sand.u32 %s180, 7
    %s192 = sshra.s32 %s180, 3
    %s193 = sand.u32 %s180, 7
    %s194 = smul.u32 %s190, 3
    %s195 = smul.u32 %s194, 8
    %s196 = sadd.s32 %s195, %s193
    %s197 = scalar_lea.vmem [#allocation9], %s196
    %v198 = vld [vmem:[%s197] ss:$8 sm:$0x7]
    %v199 = vadd.f32 %v189, %v198
    %s200 = sld [smem:[#allocation4 + $0x3]]
    %s201 = sld [smem:[#allocation4 + $0x4]]
    %p202 = scmp.gt.s32.totalorder %s200, 20
    %s203 = scalar_select %p202, 3, %s200
    %p204 = scmp.gt.s32.totalorder %s201, 20
    %s205 = scalar_select %p204, 3, %s201
    %s206 = sshra.s32 %s203, 3
    %s207 = sand.u32 %s203, 7
    %s208 = sshra.s32 %s203, 3
    %s209 = sand.u32 %s203, 7
    %s210 = smul.u32 %s206, 3
    %s211 = smul.u32 %s210, 8
    %s212 = sadd.s32 %s211, %s209
    %s213 = scalar_lea.vmem [#allocation8], %s212
    %v214 = vld [vmem:[%s213] ss:$8 sm:$0x7]
    %s215 = sshra.s32 %s205, 3
    %s216 = sand.u32 %s205, 7
    %s217 = sshra.s32 %s205, 3
    %s218 = sand.u32 %s205, 7
    %s219 = smul.u32 %s215, 3
    %s220 = smul.u32 %s219, 8
    %s221 = sadd.s32 %s220, %s218
    %s222 = scalar_lea.vmem [#allocation9], %s221
    %v223 = vld [vmem:[%s222] ss:$8 sm:$0x7]
    %v224 = vadd.f32 %v214, %v223
    %s225 = scalar_lea.vmem [#allocation8], %s221
    %v226 = vld [vmem:[%s225] ss:$8 sm:$0x7]
    %s227 = scalar_lea.vmem [#allocation9], %s212
    %v228 = vld [vmem:[%s227] ss:$8 sm:$0x7]
    %v229 = vadd.f32 %v226, %v228
    %s230 = scalar_lea.vmem [#allocation8], %s196
    %v231 = vld [vmem:[%s230] ss:$8 sm:$0x7]
    %s232 = scalar_lea.vmem [#allocation9], %s187
    %v233 = vld [vmem:[%s232] ss:$8 sm:$0x7]
    %v234 = vadd.f32 %v231, %v233
    %s235 = scalar_lea.vmem [#allocation8], %s171
    %v236 = vld [vmem:[%s235] ss:$8 sm:$0x7]
    %s237 = scalar_lea.vmem [#allocation9], %s162
    %v238 = vld [vmem:[%s237] ss:$8 sm:$0x7]
    %v239 = vadd.f32 %v236, %v238
    %s240 = scalar_lea.vmem [#allocation8], %s146
    %v241 = vld [vmem:[%s240] ss:$8 sm:$0x7]
    %s242 = scalar_lea.vmem [#allocation9], %s137
    %v243 = vld [vmem:[%s242] ss:$8 sm:$0x7]
    %v244 = vadd.f32 %v241, %v243
    %245 = vmatprep.subr.mxu0 %v122
    %246 = vmatpush1.msra.mxu0 %v121
    %247 = vmatprep.subr.mxu0 %v119
    %248 = vmatpush1.msra.mxu0 %v118
    %249 = vmatprep.subr.mxu0 %v116
    %250 = vmatpush1.msra.mxu0 %v115
    %251 = vmatprep.subr.mxu0 %v113
    %252 = vmatpush1.msra.mxu0 %v112
    %253 = vmatprep.subr.mxu0 %v110
    %254 = vmatpush1.msra.mxu0 %v109
    %255 = vmatprep.subr.mxu0 %v107
    %256 = vmatpush1.msra.mxu0 %v106
    %257 = vmatprep.subr.mxu0 %v104
    %258 = vmatpush1.msra.mxu0 %v103
    %259 = vmatprep.subr.mxu0 %v101
    %260 = vmatpush1.msra.mxu0 %v100
    %261 = vmatprep.subr.mxu0 %v98
    %262 = vmatpush1.msra.mxu0 %v97
    %263 = vmatprep.subr.mxu0 %v95
    %264 = vmatpush1.msra.mxu0 %v94
    %265 = vmatprep.subr.mxu0 %v92
    %266 = vmatpush1.msra.mxu0 %v91
    %267 = vmatprep.subr.mxu0 %v89
    %268 = vmatpush1.msra.mxu0 %v88
    %269 = vmatprep.subr.mxu0 %v86
    %270 = vmatpush1.msra.mxu0 %v85
    %271 = vmatprep.subr.mxu0 %v83
    %272 = vmatpush1.msra.mxu0 %v82
    %273 = vmatprep.subr.mxu0 %v80
    %274 = vmatpush1.msra.mxu0 %v79
    %275 = vmatprep.subr.mxu0 %v77
    %276 = vmatpush1.msra.mxu0 %v76
    %277 = vmatprep.subr.mxu0 0.0
    %278 = vmatpush2.msra.mxu0 0.0
    %279 = vmatprep.subr.mxu0 0.0
    %280 = vmatpush2.msra.mxu0 0.0
    %281 = vmatprep.subr.mxu0 0.0
    %282 = vmatpush2.msra.mxu0 0.0
    %283 = vmatprep.subr.mxu0 0.0
    %284 = vmatpush2.msra.mxu0 0.0
    %285 = vmatprep.subr.mxu0 0.0
    %286 = vmatpush2.msra.mxu0 0.0
    %287 = vmatprep.subr.mxu0 0.0
    %288 = vmatpush2.msra.mxu0 0.0
    %289 = vmatprep.subr.mxu0 0.0
    %290 = vmatpush2.msra.mxu0 0.0
    %291 = vmatprep.subr.mxu0 0.0
    %292 = vmatpush2.msra.mxu0 0.0
    %293 = vmatprep.subr.mxu0 0.0
    %294 = vmatpush2.msra.mxu0 0.0
    %295 = vmatprep.subr.mxu0 0.0
    %296 = vmatpush2.msra.mxu0 0.0
    %297 = vmatprep.subr.mxu0 0.0
    %298 = vmatpush2.msra.mxu0 0.0
    %299 = vmatprep.subr.mxu0 0.0
    %300 = vmatpush2.msra.mxu0 0.0
    %301 = vmatprep.subr.mxu0 0.0
    %302 = vmatpush2.msra.mxu0 0.0
    %303 = vmatprep.subr.mxu0 0.0
    %304 = vmatpush2.msra.mxu0 0.0
    %305 = vmatprep.subr.mxu0 0.0
    %306 = vmatpush2.msra.mxu0 0.0
    %307 = vmatprep.subr.mxu0 0.0
    %308 = vmatpush2.msra.mxu0 0.0
    %309 = vmatprep.mubr.f32.mxu0 0.0
    %310 = vmatmul.mubr.f32.gmra.mxu0 0.0
    %v311 = vpop.f32.mrf.mxu0
    %v312 = vadd.f32 0.0, %v311
    %v313 = vpop.f32.mrf.mxu0
    %v314 = vadd.f32 0.0, %v313
    %315 = vdwg.mxu0
    %316 = vmatprep.subr.mxu0 0.0
    %317 = vmatpush1.msra.mxu0 %v123
    %318 = vmatprep.subr.mxu0 0.0
    %319 = vmatpush1.msra.mxu0 %v120
    %320 = vmatprep.subr.mxu0 0.0
    %321 = vmatpush1.msra.mxu0 %v117
    %322 = vmatprep.subr.mxu0 0.0
    %323 = vmatpush1.msra.mxu0 %v114
    %324 = vmatprep.subr.mxu0 0.0
    %325 = vmatpush1.msra.mxu0 %v111
    %326 = vmatprep.subr.mxu0 0.0
    %327 = vmatpush1.msra.mxu0 %v108
    %328 = vmatprep.subr.mxu0 0.0
    %329 = vmatpush1.msra.mxu0 %v105
    %330 = vmatprep.subr.mxu0 0.0
    %331 = vmatpush1.msra.mxu0 %v102
    %332 = vmatprep.subr.mxu0 0.0
    %333 = vmatpush1.msra.mxu0 %v99
    %334 = vmatprep.subr.mxu0 0.0
    %335 = vmatpush1.msra.mxu0 %v96
    %336 = vmatprep.subr.mxu0 0.0
    %337 = vmatpush1.msra.mxu0 %v93
    %338 = vmatprep.subr.mxu0 0.0
    %339 = vmatpush1.msra.mxu0 %v90
    %340 = vmatprep.subr.mxu0 0.0
    %341 = vmatpush1.msra.mxu0 %v87
    %342 = vmatprep.subr.mxu0 0.0
    %343 = vmatpush1.msra.mxu0 %v84
    %344 = vmatprep.subr.mxu0 0.0
    %345 = vmatpush1.msra.mxu0 %v81
    %346 = vmatprep.subr.mxu0 0.0
    %347 = vmatpush1.msra.mxu0 %v78
    %348 = vmatprep.subr.mxu0 0.0
    %349 = vmatpush2.msra.mxu0 0.0
    %350 = vmatprep.subr.mxu0 0.0
    %351 = vmatpush2.msra.mxu0 0.0
    %352 = vmatprep.subr.mxu0 0.0
    %353 = vmatpush2.msra.mxu0 0.0
    %354 = vmatprep.subr.mxu0 0.0
    %355 = vmatpush2.msra.mxu0 0.0
    %356 = vmatprep.subr.mxu0 0.0
    %357 = vmatpush2.msra.mxu0 0.0
    %358 = vmatprep.subr.mxu0 0.0
    %359 = vmatpush2.msra.mxu0 0.0
    %360 = vmatprep.subr.mxu0 0.0
    %361 = vmatpush2.msra.mxu0 0.0
    %362 = vmatprep.subr.mxu0 0.0
    %363 = vmatpush2.msra.mxu0 0.0
    %364 = vmatprep.subr.mxu0 0.0
    %365 = vmatpush2.msra.mxu0 0.0
    %366 = vmatprep.subr.mxu0 0.0
    %367 = vmatpush2.msra.mxu0 0.0
    %368 = vmatprep.subr.mxu0 0.0
    %369 = vmatpush2.msra.mxu0 0.0
    %370 = vmatprep.subr.mxu0 0.0
    %371 = vmatpush2.msra.mxu0 0.0
    %372 = vmatprep.subr.mxu0 0.0
    %373 = vmatpush2.msra.mxu0 0.0
    %374 = vmatprep.subr.mxu0 0.0
    %375 = vmatpush2.msra.mxu0 0.0
    %376 = vmatprep.subr.mxu0 0.0
    %377 = vmatpush2.msra.mxu0 0.0
    %378 = vmatprep.subr.mxu0 0.0
    %379 = vmatpush2.msra.mxu0 0.0
    %380 = vmatprep.mubr.f32.mxu0 0.0
    %381 = vmatmul.mubr.f32.gmra.mxu0 0.0
    %v382 = vpop.f32.mrf.mxu0
    %v383 = vadd.f32 0.0, %v382
    %v384 = vpop.f32.mrf.mxu0
    %385 = vdwg.mxu0
    %v386 = vadd.f32 %v149, %v312
    %v387 = vxor.u32 %v386, 2147483648
    %v388 = vmul.f32 %v387, 1.442695
    %v389 = vpow.pop %v388
    %v390 = vadd.f32 %v389, 1.0
    %v391 = vrcp.pop %v390
    %v392 = vmul.f32 1.0, %v391
    %v394 = vrot.slane %v149, 1
    %v396 = vadd.f32 %v394, %v314
    %v397 = vxor.u32 %v396, 2147483648
    %v398 = vmul.f32 %v397, 1.442695
    %v399 = vpow.pop %v398
    %v400 = vadd.f32 %v399, 1.0
    %v401 = vrcp.pop %v400
    %v402 = vmul.f32 1.0, %v401
    %v403 = vadd.f32 %v383, %v124
    %v404 = vmul.f32 %v392, %v403
    %v405 = vrot.slane %v149, 2
    %v407 = vadd.f32 %v405, %v404
    %v408 = vtanh.pop %v407
    %v409 = vsub.f32 1.0, %v402
    %v410 = vmul.f32 %v409, %v408
    %v411 = vmul.f32 %v402, 0.0
    %v412 = vadd.f32 %v410, %v411
    %413 = vst [vmem:[#allocation2] sm:$0x1] %v412
    %414 = vst [vmem:[#allocation3 + $0x7] sm:$0x1] %v412
    %415 = vmatprep.subr.mxu0 %v122
    %416 = vmatpush1.msra.mxu0 %v121
    %417 = vmatprep.subr.mxu0 %v119
    %418 = vmatpush1.msra.mxu0 %v118
    %419 = vmatprep.subr.mxu0 %v116
    %420 = vmatpush1.msra.mxu0 %v115
    %421 = vmatprep.subr.mxu0 %v113
    %422 = vmatpush1.msra.mxu0 %v112
    %423 = vmatprep.subr.mxu0 %v110
    %424 = vmatpush1.msra.mxu0 %v109
    %425 = vmatprep.subr.mxu0 %v107
    %426 = vmatpush1.msra.mxu0 %v106
    %427 = vmatprep.subr.mxu0 %v104
    %428 = vmatpush1.msra.mxu0 %v103
    %429 = vmatprep.subr.mxu0 %v101
    %430 = vmatpush1.msra.mxu0 %v100
    %431 = vmatprep.subr.mxu0 %v98
    %432 = vmatpush1.msra.mxu0 %v97
    %433 = vmatprep.subr.mxu0 %v95
    %434 = vmatpush1.msra.mxu0 %v94
    %435 = vmatprep.subr.mxu0 %v92
    %436 = vmatpush1.msra.mxu0 %v91
    %437 = vmatprep.subr.mxu0 %v89
    %438 = vmatpush1.msra.mxu0 %v88
    %439 = vmatprep.subr.mxu0 %v86
    %440 = vmatpush1.msra.mxu0 %v85
    %441 = vmatprep.subr.mxu0 %v83
    %442 = vmatpush1.msra.mxu0 %v82
    %443 = vmatprep.subr.mxu0 %v80
    %444 = vmatpush1.msra.mxu0 %v79
    %445 = vmatprep.subr.mxu0 %v77
    %446 = vmatpush1.msra.mxu0 %v76
    %447 = vmatprep.subr.mxu0 0.0
    %448 = vmatpush2.msra.mxu0 0.0
    %449 = vmatprep.subr.mxu0 0.0
    %450 = vmatpush2.msra.mxu0 0.0
    %451 = vmatprep.subr.mxu0 0.0
    %452 = vmatpush2.msra.mxu0 0.0
    %453 = vmatprep.subr.mxu0 0.0
    %454 = vmatpush2.msra.mxu0 0.0
    %455 = vmatprep.subr.mxu0 0.0
    %456 = vmatpush2.msra.mxu0 0.0
    %457 = vmatprep.subr.mxu0 0.0
    %458 = vmatpush2.msra.mxu0 0.0
    %459 = vmatprep.subr.mxu0 0.0
    %460 = vmatpush2.msra.mxu0 0.0
    %461 = vmatprep.subr.mxu0 0.0
    %462 = vmatpush2.msra.mxu0 0.0
    %463 = vmatprep.subr.mxu0 0.0
    %464 = vmatpush2.msra.mxu0 0.0
    %465 = vmatprep.subr.mxu0 0.0
    %466 = vmatpush2.msra.mxu0 0.0
    %467 = vmatprep.subr.mxu0 0.0
    %468 = vmatpush2.msra.mxu0 0.0
    %469 = vmatprep.subr.mxu0 0.0
    %470 = vmatpush2.msra.mxu0 0.0
    %471 = vmatprep.subr.mxu0 0.0
    %472 = vmatpush2.msra.mxu0 0.0
    %473 = vmatprep.subr.mxu0 0.0
    %474 = vmatpush2.msra.mxu0 0.0
    %475 = vmatprep.subr.mxu0 0.0
    %476 = vmatpush2.msra.mxu0 0.0
    %477 = vmatprep.subr.mxu0 0.0
    %478 = vmatpush2.msra.mxu0 0.0
    %479 = vmatprep.mubr.f32.mxu0 0.0
    %480 = vmatmul.mubr.f32.gmra.mxu0 %v412
    %v481 = vpop.f32.mrf.mxu0
    %v482 = vadd.f32 0.0, %v481
    %v483 = vpop.f32.mrf.mxu0
    %v484 = vadd.f32 0.0, %v483
    %485 = vdwg.mxu0
    %486 = vmatprep.subr.mxu0 0.0
    %487 = vmatpush1.msra.mxu0 %v123
    %488 = vmatprep.subr.mxu0 0.0
    %489 = vmatpush1.msra.mxu0 %v120
    %490 = vmatprep.subr.mxu0 0.0
    %491 = vmatpush1.msra.mxu0 %v117
    %492 = vmatprep.subr.mxu0 0.0
    %493 = vmatpush1.msra.mxu0 %v114
    %494 = vmatprep.subr.mxu0 0.0
    %495 = vmatpush1.msra.mxu0 %v111
    %496 = vmatprep.subr.mxu0 0.0
    %497 = vmatpush1.msra.mxu0 %v108
    %498 = vmatprep.subr.mxu0 0.0
    %499 = vmatpush1.msra.mxu0 %v105
    %500 = vmatprep.subr.mxu0 0.0
    %501 = vmatpush1.msra.mxu0 %v102
    %502 = vmatprep.subr.mxu0 0.0
    %503 = vmatpush1.msra.mxu0 %v99
    %504 = vmatprep.subr.mxu0 0.0
    %505 = vmatpush1.msra.mxu0 %v96
    %506 = vmatprep.subr.mxu0 0.0
    %507 = vmatpush1.msra.mxu0 %v93
    %508 = vmatprep.subr.mxu0 0.0
    %509 = vmatpush1.msra.mxu0 %v90
    %510 = vmatprep.subr.mxu0 0.0
    %511 = vmatpush1.msra.mxu0 %v87
    %512 = vmatprep.subr.mxu0 0.0
    %513 = vmatpush1.msra.mxu0 %v84
    %514 = vmatprep.subr.mxu0 0.0
    %515 = vmatpush1.msra.mxu0 %v81
    %516 = vmatprep.subr.mxu0 0.0
    %517 = vmatpush1.msra.mxu0 %v78
    %518 = vmatprep.subr.mxu0 0.0
    %519 = vmatpush2.msra.mxu0 0.0
    %520 = vmatprep.subr.mxu0 0.0
    %521 = vmatpush2.msra.mxu0 0.0
    %522 = vmatprep.subr.mxu0 0.0
    %523 = vmatpush2.msra.mxu0 0.0
    %524 = vmatprep.subr.mxu0 0.0
    %525 = vmatpush2.msra.mxu0 0.0
    %526 = vmatprep.subr.mxu0 0.0
    %527 = vmatpush2.msra.mxu0 0.0
    %528 = vmatprep.subr.mxu0 0.0
    %529 = vmatpush2.msra.mxu0 0.0
    %530 = vmatprep.subr.mxu0 0.0
    %531 = vmatpush2.msra.mxu0 0.0
    %532 = vmatprep.subr.mxu0 0.0
    %533 = vmatpush2.msra.mxu0 0.0
    %534 = vmatprep.subr.mxu0 0.0
    %535 = vmatpush2.msra.mxu0 0.0
    %536 = vmatprep.subr.mxu0 0.0
    %537 = vmatpush2.msra.mxu0 0.0
    %538 = vmatprep.subr.mxu0 0.0
    %539 = vmatpush2.msra.mxu0 0.0
    %540 = vmatprep.subr.mxu0 0.0
    %541 = vmatpush2.msra.mxu0 0.0
    %542 = vmatprep.subr.mxu0 0.0
    %543 = vmatpush2.msra.mxu0 0.0
    %544 = vmatprep.subr.mxu0 0.0
    %545 = vmatpush2.msra.mxu0 0.0
    %546 = vmatprep.subr.mxu0 0.0
    %547 = vmatpush2.msra.mxu0 0.0
    %548 = vmatprep.subr.mxu0 0.0
    %549 = vmatpush2.msra.mxu0 0.0
    %550 = vmatprep.mubr.f32.mxu0 0.0
    %551 = vmatmul.mubr.f32.gmra.mxu0 %v412
    %v552 = vpop.f32.mrf.mxu0
    %v553 = vadd.f32 0.0, %v552
    %v554 = vpop.f32.mrf.mxu0
    %555 = vdwg.mxu0
    %v556 = vadd.f32 %v174, %v482
    %v557 = vxor.u32 %v556, 2147483648
    %v558 = vmul.f32 %v557, 1.442695
    %v559 = vpow.pop %v558
    %v560 = vadd.f32 %v559, 1.0
    %v561 = vrcp.pop %v560
    %v562 = vmul.f32 1.0, %v561
    %v564 = vrot.slane %v174, 1
    %v566 = vadd.f32 %v564, %v484
    %v567 = vxor.u32 %v566, 2147483648
    %v568 = vmul.f32 %v567, 1.442695
    %v569 = vpow.pop %v568
    %v570 = vadd.f32 %v569, 1.0
    %v571 = vrcp.pop %v570
    %v572 = vmul.f32 1.0, %v571
    %v573 = vadd.f32 %v553, %v124
    %v574 = vmul.f32 %v562, %v573
    %v575 = vrot.slane %v174, 2
    %v577 = vadd.f32 %v575, %v574
    %v578 = vtanh.pop %v577
    %v579 = vsub.f32 1.0, %v572
    %v580 = vmul.f32 %v579, %v578
    %v581 = vmul.f32 %v572, %v412
    %v582 = vadd.f32 %v580, %v581
    %583 = vst [vmem:[#allocation2 + $0x1] sm:$0x1] %v582
    %584 = vst [vmem:[#allocation3 + $0x6] sm:$0x1] %v582
    %585 = vmatprep.subr.mxu0 %v122
    %586 = vmatpush1.msra.mxu0 %v121
    %587 = vmatprep.subr.mxu0 %v119
    %588 = vmatpush1.msra.mxu0 %v118
    %589 = vmatprep.subr.mxu0 %v116
    %590 = vmatpush1.msra.mxu0 %v115
    %591 = vmatprep.subr.mxu0 %v113
    %592 = vmatpush1.msra.mxu0 %v112
    %593 = vmatprep.subr.mxu0 %v110
    %594 = vmatpush1.msra.mxu0 %v109
    %595 = vmatprep.subr.mxu0 %v107
    %596 = vmatpush1.msra.mxu0 %v106
    %597 = vmatprep.subr.mxu0 %v104
    %598 = vmatpush1.msra.mxu0 %v103
    %599 = vmatprep.subr.mxu0 %v101
    %600 = vmatpush1.msra.mxu0 %v100
    %601 = vmatprep.subr.mxu0 %v98
    %602 = vmatpush1.msra.mxu0 %v97
    %603 = vmatprep.subr.mxu0 %v95
    %604 = vmatpush1.msra.mxu0 %v94
    %605 = vmatprep.subr.mxu0 %v92
    %606 = vmatpush1.msra.mxu0 %v91
    %607 = vmatprep.subr.mxu0 %v89
    %608 = vmatpush1.msra.mxu0 %v88
    %609 = vmatprep.subr.mxu0 %v86
    %610 = vmatpush1.msra.mxu0 %v85
    %611 = vmatprep.subr.mxu0 %v83
    %612 = vmatpush1.msra.mxu0 %v82
    %613 = vmatprep.subr.mxu0 %v80
    %614 = vmatpush1.msra.mxu0 %v79
    %615 = vmatprep.subr.mxu0 %v77
    %616 = vmatpush1.msra.mxu0 %v76
    %617 = vmatprep.subr.mxu0 0.0
    %618 = vmatpush2.msra.mxu0 0.0
    %619 = vmatprep.subr.mxu0 0.0
    %620 = vmatpush2.msra.mxu0 0.0
    %621 = vmatprep.subr.mxu0 0.0
    %622 = vmatpush2.msra.mxu0 0.0
    %623 = vmatprep.subr.mxu0 0.0
    %624 = vmatpush2.msra.mxu0 0.0
    %625 = vmatprep.subr.mxu0 0.0
    %626 = vmatpush2.msra.mxu0 0.0
    %627 = vmatprep.subr.mxu0 0.0
    %628 = vmatpush2.msra.mxu0 0.0
    %629 = vmatprep.subr.mxu0 0.0
    %630 = vmatpush2.msra.mxu0 0.0
    %631 = vmatprep.subr.mxu0 0.0
    %632 = vmatpush2.msra.mxu0 0.0
    %633 = vmatprep.subr.mxu0 0.0
    %634 = vmatpush2.msra.mxu0 0.0
    %635 = vmatprep.subr.mxu0 0.0
    %636 = vmatpush2.msra.mxu0 0.0
    %637 = vmatprep.subr.mxu0 0.0
    %638 = vmatpush2.msra.mxu0 0.0
    %639 = vmatprep.subr.mxu0 0.0
    %640 = vmatpush2.msra.mxu0 0.0
    %641 = vmatprep.subr.mxu0 0.0
    %642 = vmatpush2.msra.mxu0 0.0
    %643 = vmatprep.subr.mxu0 0.0
    %644 = vmatpush2.msra.mxu0 0.0
    %645 = vmatprep.subr.mxu0 0.0
    %646 = vmatpush2.msra.mxu0 0.0
    %647 = vmatprep.subr.mxu0 0.0
    %648 = vmatpush2.msra.mxu0 0.0
    %649 = vmatprep.mubr.f32.mxu0 0.0
    %650 = vmatmul.mubr.f32.gmra.mxu0 %v582
    %v651 = vpop.f32.mrf.mxu0
    %v652 = vadd.f32 0.0, %v651
    %v653 = vpop.f32.mrf.mxu0
    %v654 = vadd.f32 0.0, %v653
    %655 = vdwg.mxu0
    %656 = vmatprep.subr.mxu0 0.0
    %657 = vmatpush1.msra.mxu0 %v123
    %658 = vmatprep.subr.mxu0 0.0
    %659 = vmatpush1.msra.mxu0 %v120
    %660 = vmatprep.subr.mxu0 0.0
    %661 = vmatpush1.msra.mxu0 %v117
    %662 = vmatprep.subr.mxu0 0.0
    %663 = vmatpush1.msra.mxu0 %v114
    %664 = vmatprep.subr.mxu0 0.0
    %665 = vmatpush1.msra.mxu0 %v111
    %666 = vmatprep.subr.mxu0 0.0
    %667 = vmatpush1.msra.mxu0 %v108
    %668 = vmatprep.subr.mxu0 0.0
    %669 = vmatpush1.msra.mxu0 %v105
    %670 = vmatprep.subr.mxu0 0.0
    %671 = vmatpush1.msra.mxu0 %v102
    %672 = vmatprep.subr.mxu0 0.0
    %673 = vmatpush1.msra.mxu0 %v99
    %674 = vmatprep.subr.mxu0 0.0
    %675 = vmatpush1.msra.mxu0 %v96
    %676 = vmatprep.subr.mxu0 0.0
    %677 = vmatpush1.msra.mxu0 %v93
    %678 = vmatprep.subr.mxu0 0.0
    %679 = vmatpush1.msra.mxu0 %v90
    %680 = vmatprep.subr.mxu0 0.0
    %681 = vmatpush1.msra.mxu0 %v87
    %682 = vmatprep.subr.mxu0 0.0
    %683 = vmatpush1.msra.mxu0 %v84
    %684 = vmatprep.subr.mxu0 0.0
    %685 = vmatpush1.msra.mxu0 %v81
    %686 = vmatprep.subr.mxu0 0.0
    %687 = vmatpush1.msra.mxu0 %v78
    %688 = vmatprep.subr.mxu0 0.0
    %689 = vmatpush2.msra.mxu0 0.0
    %690 = vmatprep.subr.mxu0 0.0
    %691 = vmatpush2.msra.mxu0 0.0
    %692 = vmatprep.subr.mxu0 0.0
    %693 = vmatpush2.msra.mxu0 0.0
    %694 = vmatprep.subr.mxu0 0.0
    %695 = vmatpush2.msra.mxu0 0.0
    %696 = vmatprep.subr.mxu0 0.0
    %697 = vmatpush2.msra.mxu0 0.0
    %698 = vmatprep.subr.mxu0 0.0
    %699 = vmatpush2.msra.mxu0 0.0
    %700 = vmatprep.subr.mxu0 0.0
    %701 = vmatpush2.msra.mxu0 0.0
    %702 = vmatprep.subr.mxu0 0.0
    %703 = vmatpush2.msra.mxu0 0.0
    %704 = vmatprep.subr.mxu0 0.0
    %705 = vmatpush2.msra.mxu0 0.0
    %706 = vmatprep.subr.mxu0 0.0
    %707 = vmatpush2.msra.mxu0 0.0
    %708 = vmatprep.subr.mxu0 0.0
    %709 = vmatpush2.msra.mxu0 0.0
    %710 = vmatprep.subr.mxu0 0.0
    %711 = vmatpush2.msra.mxu0 0.0
    %712 = vmatprep.subr.mxu0 0.0
    %713 = vmatpush2.msra.mxu0 0.0
    %714 = vmatprep.subr.mxu0 0.0
    %715 = vmatpush2.msra.mxu0 0.0
    %716 = vmatprep.subr.mxu0 0.0
    %717 = vmatpush2.msra.mxu0 0.0
    %718 = vmatprep.subr.mxu0 0.0
    %719 = vmatpush2.msra.mxu0 0.0
    %720 = vmatprep.mubr.f32.mxu0 0.0
    %721 = vmatmul.mubr.f32.gmra.mxu0 %v582
    %v722 = vpop.f32.mrf.mxu0
    %v723 = vadd.f32 0.0, %v722
    %v724 = vpop.f32.mrf.mxu0
    %725 = vdwg.mxu0
    %v726 = vadd.f32 %v199, %v652
    %v727 = vxor.u32 %v726, 2147483648
    %v728 = vmul.f32 %v727, 1.442695
    %v729 = vpow.pop %v728
    %v730 = vadd.f32 %v729, 1.0
    %v731 = vrcp.pop %v730
    %v732 = vmul.f32 1.0, %v731
    %v734 = vrot.slane %v199, 1
    %v736 = vadd.f32 %v734, %v654
    %v737 = vxor.u32 %v736, 2147483648
    %v738 = vmul.f32 %v737, 1.442695
    %v739 = vpow.pop %v738
    %v740 = vadd.f32 %v739, 1.0
    %v741 = vrcp.pop %v740
    %v742 = vmul.f32 1.0, %v741
    %v743 = vadd.f32 %v723, %v124
    %v744 = vmul.f32 %v732, %v743
    %v745 = vrot.slane %v199, 2
    %v747 = vadd.f32 %v745, %v744
    %v748 = vtanh.pop %v747
    %v749 = vsub.f32 1.0, %v742
    %v750 = vmul.f32 %v749, %v748
    %v751 = vmul.f32 %v742, %v582
    %v752 = vadd.f32 %v750, %v751
    %753 = vst [vmem:[#allocation2 + $0x2] sm:$0x1] %v752
    %754 = vst [vmem:[#allocation3 + $0x5] sm:$0x1] %v752
    %755 = vmatprep.subr.mxu0 %v122
    %756 = vmatpush1.msra.mxu0 %v121
    %757 = vmatprep.subr.mxu0 %v119
    %758 = vmatpush1.msra.mxu0 %v118
    %759 = vmatprep.subr.mxu0 %v116
    %760 = vmatpush1.msra.mxu0 %v115
    %761 = vmatprep.subr.mxu0 %v113
    %762 = vmatpush1.msra.mxu0 %v112
    %763 = vmatprep.subr.mxu0 %v110
    %764 = vmatpush1.msra.mxu0 %v109
    %765 = vmatprep.subr.mxu0 %v107
    %766 = vmatpush1.msra.mxu0 %v106
    %767 = vmatprep.subr.mxu0 %v104
    %768 = vmatpush1.msra.mxu0 %v103
    %769 = vmatprep.subr.mxu0 %v101
    %770 = vmatpush1.msra.mxu0 %v100
    %771 = vmatprep.subr.mxu0 %v98
    %772 = vmatpush1.msra.mxu0 %v97
    %773 = vmatprep.subr.mxu0 %v95
    %774 = vmatpush1.msra.mxu0 %v94
    %775 = vmatprep.subr.mxu0 %v92
    %776 = vmatpush1.msra.mxu0 %v91
    %777 = vmatprep.subr.mxu0 %v89
    %778 = vmatpush1.msra.mxu0 %v88
    %779 = vmatprep.subr.mxu0 %v86
    %780 = vmatpush1.msra.mxu0 %v85
    %781 = vmatprep.subr.mxu0 %v83
    %782 = vmatpush1.msra.mxu0 %v82
    %783 = vmatprep.subr.mxu0 %v80
    %784 = vmatpush1.msra.mxu0 %v79
    %785 = vmatprep.subr.mxu0 %v77
    %786 = vmatpush1.msra.mxu0 %v76
    %787 = vmatprep.subr.mxu0 0.0
    %788 = vmatpush2.msra.mxu0 0.0
    %789 = vmatprep.subr.mxu0 0.0
    %790 = vmatpush2.msra.mxu0 0.0
    %791 = vmatprep.subr.mxu0 0.0
    %792 = vmatpush2.msra.mxu0 0.0
    %793 = vmatprep.subr.mxu0 0.0
    %794 = vmatpush2.msra.mxu0 0.0
    %795 = vmatprep.subr.mxu0 0.0
    %796 = vmatpush2.msra.mxu0 0.0
    %797 = vmatprep.subr.mxu0 0.0
    %798 = vmatpush2.msra.mxu0 0.0
    %799 = vmatprep.subr.mxu0 0.0
    %800 = vmatpush2.msra.mxu0 0.0
    %801 = vmatprep.subr.mxu0 0.0
    %802 = vmatpush2.msra.mxu0 0.0
    %803 = vmatprep.subr.mxu0 0.0
    %804 = vmatpush2.msra.mxu0 0.0
    %805 = vmatprep.subr.mxu0 0.0
    %806 = vmatpush2.msra.mxu0 0.0
    %807 = vmatprep.subr.mxu0 0.0
    %808 = vmatpush2.msra.mxu0 0.0
    %809 = vmatprep.subr.mxu0 0.0
    %810 = vmatpush2.msra.mxu0 0.0
    %811 = vmatprep.subr.mxu0 0.0
    %812 = vmatpush2.msra.mxu0 0.0
    %813 = vmatprep.subr.mxu0 0.0
    %814 = vmatpush2.msra.mxu0 0.0
    %815 = vmatprep.subr.mxu0 0.0
    %816 = vmatpush2.msra.mxu0 0.0
    %817 = vmatprep.subr.mxu0 0.0
    %818 = vmatpush2.msra.mxu0 0.0
    %819 = vmatprep.mubr.f32.mxu0 0.0
    %820 = vmatmul.mubr.f32.gmra.mxu0 %v752
    %v821 = vpop.f32.mrf.mxu0
    %v822 = vadd.f32 0.0, %v821
    %v823 = vpop.f32.mrf.mxu0
    %v824 = vadd.f32 0.0, %v823
    %825 = vdwg.mxu0
    %826 = vmatprep.subr.mxu0 0.0
    %827 = vmatpush1.msra.mxu0 %v123
    %828 = vmatprep.subr.mxu0 0.0
    %829 = vmatpush1.msra.mxu0 %v120
    %830 = vmatprep.subr.mxu0 0.0
    %831 = vmatpush1.msra.mxu0 %v117
    %832 = vmatprep.subr.mxu0 0.0
    %833 = vmatpush1.msra.mxu0 %v114
    %834 = vmatprep.subr.mxu0 0.0
    %835 = vmatpush1.msra.mxu0 %v111
    %836 = vmatprep.subr.mxu0 0.0
    %837 = vmatpush1.msra.mxu0 %v108
    %838 = vmatprep.subr.mxu0 0.0
    %839 = vmatpush1.msra.mxu0 %v105
    %840 = vmatprep.subr.mxu0 0.0
    %841 = vmatpush1.msra.mxu0 %v102
    %842 = vmatprep.subr.mxu0 0.0
    %843 = vmatpush1.msra.mxu0 %v99
    %844 = vmatprep.subr.mxu0 0.0
    %845 = vmatpush1.msra.mxu0 %v96
    %846 = vmatprep.subr.mxu0 0.0
    %847 = vmatpush1.msra.mxu0 %v93
    %848 = vmatprep.subr.mxu0 0.0
    %849 = vmatpush1.msra.mxu0 %v90
    %850 = vmatprep.subr.mxu0 0.0
    %851 = vmatpush1.msra.mxu0 %v87
    %852 = vmatprep.subr.mxu0 0.0
    %853 = vmatpush1.msra.mxu0 %v84
    %854 = vmatprep.subr.mxu0 0.0
    %855 = vmatpush1.msra.mxu0 %v81
    %856 = vmatprep.subr.mxu0 0.0
    %857 = vmatpush1.msra.mxu0 %v78
    %858 = vmatprep.subr.mxu0 0.0
    %859 = vmatpush2.msra.mxu0 0.0
    %860 = vmatprep.subr.mxu0 0.0
    %861 = vmatpush2.msra.mxu0 0.0
    %862 = vmatprep.subr.mxu0 0.0
    %863 = vmatpush2.msra.mxu0 0.0
    %864 = vmatprep.subr.mxu0 0.0
    %865 = vmatpush2.msra.mxu0 0.0
    %866 = vmatprep.subr.mxu0 0.0
    %867 = vmatpush2.msra.mxu0 0.0
    %868 = vmatprep.subr.mxu0 0.0
    %869 = vmatpush2.msra.mxu0 0.0
    %870 = vmatprep.subr.mxu0 0.0
    %871 = vmatpush2.msra.mxu0 0.0
    %872 = vmatprep.subr.mxu0 0.0
    %873 = vmatpush2.msra.mxu0 0.0
    %874 = vmatprep.subr.mxu0 0.0
    %875 = vmatpush2.msra.mxu0 0.0
    %876 = vmatprep.subr.mxu0 0.0
    %877 = vmatpush2.msra.mxu0 0.0
    %878 = vmatprep.subr.mxu0 0.0
    %879 = vmatpush2.msra.mxu0 0.0
    %880 = vmatprep.subr.mxu0 0.0
    %881 = vmatpush2.msra.mxu0 0.0
    %882 = vmatprep.subr.mxu0 0.0
    %883 = vmatpush2.msra.mxu0 0.0
    %884 = vmatprep.subr.mxu0 0.0
    %885 = vmatpush2.msra.mxu0 0.0
    %886 = vmatprep.subr.mxu0 0.0
    %887 = vmatpush2.msra.mxu0 0.0
    %888 = vmatprep.subr.mxu0 0.0
    %889 = vmatpush2.msra.mxu0 0.0
    %890 = vmatprep.mubr.f32.mxu0 0.0
    %891 = vmatmul.mubr.f32.gmra.mxu0 %v752
    %v892 = vpop.f32.mrf.mxu0
    %v893 = vadd.f32 0.0, %v892
    %v894 = vpop.f32.mrf.mxu0
    %895 = vdwg.mxu0
    %v896 = vadd.f32 %v224, %v822
    %v897 = vxor.u32 %v896, 2147483648
    %v898 = vmul.f32 %v897, 1.442695
    %v899 = vpow.pop %v898
    %v900 = vadd.f32 %v899, 1.0
    %v901 = vrcp.pop %v900
    %v902 = vmul.f32 1.0, %v901
    %v904 = vrot.slane %v224, 1
    %v906 = vadd.f32 %v904, %v824
    %v907 = vxor.u32 %v906, 2147483648
    %v908 = vmul.f32 %v907, 1.442695
    %v909 = vpow.pop %v908
    %v910 = vadd.f32 %v909, 1.0
    %v911 = vrcp.pop %v910
    %v912 = vmul.f32 1.0, %v911
    %v913 = vadd.f32 %v893, %v124
    %v914 = vmul.f32 %v902, %v913
    %v915 = vrot.slane %v224, 2
    %v917 = vadd.f32 %v915, %v914
    %v918 = vtanh.pop %v917
    %v919 = vsub.f32 1.0, %v912
    %v920 = vmul.f32 %v919, %v918
    %v921 = vmul.f32 %v912, %v752
    %v922 = vadd.f32 %v920, %v921
    %923 = vst [vmem:[#allocation2 + $0x3] sm:$0x1] %v922
    %924 = vst [vmem:[#allocation3 + $0x4] sm:$0x1] %v922
    %925 = vmatprep.subr.mxu0 %v122
    %926 = vmatpush1.msra.mxu0 %v121
    %927 = vmatprep.subr.mxu0 %v119
    %928 = vmatpush1.msra.mxu0 %v118
    %929 = vmatprep.subr.mxu0 %v116
    %930 = vmatpush1.msra.mxu0 %v115
    %931 = vmatprep.subr.mxu0 %v113
    %932 = vmatpush1.msra.mxu0 %v112
    %933 = vmatprep.subr.mxu0 %v110
    %934 = vmatpush1.msra.mxu0 %v109
    %935 = vmatprep.subr.mxu0 %v107
    %936 = vmatpush1.msra.mxu0 %v106
    %937 = vmatprep.subr.mxu0 %v104
    %938 = vmatpush1.msra.mxu0 %v103
    %939 = vmatprep.subr.mxu0 %v101
    %940 = vmatpush1.msra.mxu0 %v100
    %941 = vmatprep.subr.mxu0 %v98
    %942 = vmatpush1.msra.mxu0 %v97
    %943 = vmatprep.subr.mxu0 %v95
    %944 = vmatpush1.msra.mxu0 %v94
    %945 = vmatprep.subr.mxu0 %v92
    %946 = vmatpush1.msra.mxu0 %v91
    %947 = vmatprep.subr.mxu0 %v89
    %948 = vmatpush1.msra.mxu0 %v88
    %949 = vmatprep.subr.mxu0 %v86
    %950 = vmatpush1.msra.mxu0 %v85
    %951 = vmatprep.subr.mxu0 %v83
    %952 = vmatpush1.msra.mxu0 %v82
    %953 = vmatprep.subr.mxu0 %v80
    %954 = vmatpush1.msra.mxu0 %v79
    %955 = vmatprep.subr.mxu0 %v77
    %956 = vmatpush1.msra.mxu0 %v76
    %957 = vmatprep.subr.mxu0 0.0
    %958 = vmatpush2.msra.mxu0 0.0
    %959 = vmatprep.subr.mxu0 0.0
    %960 = vmatpush2.msra.mxu0 0.0
    %961 = vmatprep.subr.mxu0 0.0
    %962 = vmatpush2.msra.mxu0 0.0
    %963 = vmatprep.subr.mxu0 0.0
    %964 = vmatpush2.msra.mxu0 0.0
    %965 = vmatprep.subr.mxu0 0.0
    %966 = vmatpush2.msra.mxu0 0.0
    %967 = vmatprep.subr.mxu0 0.0
    %968 = vmatpush2.msra.mxu0 0.0
    %969 = vmatprep.subr.mxu0 0.0
    %970 = vmatpush2.msra.mxu0 0.0
    %971 = vmatprep.subr.mxu0 0.0
    %972 = vmatpush2.msra.mxu0 0.0
    %973 = vmatprep.subr.mxu0 0.0
    %974 = vmatpush2.msra.mxu0 0.0
    %975 = vmatprep.subr.mxu0 0.0
    %976 = vmatpush2.msra.mxu0 0.0
    %977 = vmatprep.subr.mxu0 0.0
    %978 = vmatpush2.msra.mxu0 0.0
    %979 = vmatprep.subr.mxu0 0.0
    %980 = vmatpush2.msra.mxu0 0.0
    %981 = vmatprep.subr.mxu0 0.0
    %982 = vmatpush2.msra.mxu0 0.0
    %983 = vmatprep.subr.mxu0 0.0
    %984 = vmatpush2.msra.mxu0 0.0
    %985 = vmatprep.subr.mxu0 0.0
    %986 = vmatpush2.msra.mxu0 0.0
    %987 = vmatprep.subr.mxu0 0.0
    %988 = vmatpush2.msra.mxu0 0.0
    %989 = vmatprep.mubr.f32.mxu0 0.0
    %990 = vmatmul.mubr.f32.gmra.mxu0 %v922
    %v991 = vpop.f32.mrf.mxu0
    %v992 = vadd.f32 0.0, %v991
    %v993 = vpop.f32.mrf.mxu0
    %v994 = vadd.f32 0.0, %v993
    %995 = vdwg.mxu0
    %996 = vmatprep.subr.mxu0 0.0
    %997 = vmatpush1.msra.mxu0 %v123
    %998 = vmatprep.subr.mxu0 0.0
    %999 = vmatpush1.msra.mxu0 %v120
    %1000 = vmatprep.subr.mxu0 0.0
    %1001 = vmatpush1.msra.mxu0 %v117
    %1002 = vmatprep.subr.mxu0 0.0
    %1003 = vmatpush1.msra.mxu0 %v114
    %1004 = vmatprep.subr.mxu0 0.0
    %1005 = vmatpush1.msra.mxu0 %v111
    %1006 = vmatprep.subr.mxu0 0.0
    %1007 = vmatpush1.msra.mxu0 %v108
    %1008 = vmatprep.subr.mxu0 0.0
    %1009 = vmatpush1.msra.mxu0 %v105
    %1010 = vmatprep.subr.mxu0 0.0
    %1011 = vmatpush1.msra.mxu0 %v102
    %1012 = vmatprep.subr.mxu0 0.0
    %1013 = vmatpush1.msra.mxu0 %v99
    %1014 = vmatprep.subr.mxu0 0.0
    %1015 = vmatpush1.msra.mxu0 %v96
    %1016 = vmatprep.subr.mxu0 0.0
    %1017 = vmatpush1.msra.mxu0 %v93
    %1018 = vmatprep.subr.mxu0 0.0
    %1019 = vmatpush1.msra.mxu0 %v90
    %1020 = vmatprep.subr.mxu0 0.0
    %1021 = vmatpush1.msra.mxu0 %v87
    %1022 = vmatprep.subr.mxu0 0.0
    %1023 = vmatpush1.msra.mxu0 %v84
    %1024 = vmatprep.subr.mxu0 0.0
    %1025 = vmatpush1.msra.mxu0 %v81
    %1026 = vmatprep.subr.mxu0 0.0
    %1027 = vmatpush1.msra.mxu0 %v78
    %1028 = vmatprep.subr.mxu0 0.0
    %1029 = vmatpush2.msra.mxu0 0.0
    %1030 = vmatprep.subr.mxu0 0.0
    %1031 = vmatpush2.msra.mxu0 0.0
    %1032 = vmatprep.subr.mxu0 0.0
    %1033 = vmatpush2.msra.mxu0 0.0
    %1034 = vmatprep.subr.mxu0 0.0
    %1035 = vmatpush2.msra.mxu0 0.0
    %1036 = vmatprep.subr.mxu0 0.0
    %1037 = vmatpush2.msra.mxu0 0.0
    %1038 = vmatprep.subr.mxu0 0.0
    %1039 = vmatpush2.msra.mxu0 0.0
    %1040 = vmatprep.subr.mxu0 0.0
    %1041 = vmatpush2.msra.mxu0 0.0
    %1042 = vmatprep.subr.mxu0 0.0
    %1043 = vmatpush2.msra.mxu0 0.0
    %1044 = vmatprep.subr.mxu0 0.0
    %1045 = vmatpush2.msra.mxu0 0.0
    %1046 = vmatprep.subr.mxu0 0.0
    %1047 = vmatpush2.msra.mxu0 0.0
    %1048 = vmatprep.subr.mxu0 0.0
    %1049 = vmatpush2.msra.mxu0 0.0
    %1050 = vmatprep.subr.mxu0 0.0
    %1051 = vmatpush2.msra.mxu0 0.0
    %1052 = vmatprep.subr.mxu0 0.0
    %1053 = vmatpush2.msra.mxu0 0.0
    %1054 = vmatprep.subr.mxu0 0.0
    %1055 = vmatpush2.msra.mxu0 0.0
    %1056 = vmatprep.subr.mxu0 0.0
    %1057 = vmatpush2.msra.mxu0 0.0
    %1058 = vmatprep.subr.mxu0 0.0
    %1059 = vmatpush2.msra.mxu0 0.0
    %1060 = vmatprep.mubr.f32.mxu0 0.0
    %1061 = vmatmul.mubr.f32.gmra.mxu0 %v922
    %v1062 = vpop.f32.mrf.mxu0
    %v1063 = vadd.f32 0.0, %v1062
    %v1064 = vpop.f32.mrf.mxu0
    %1065 = vdwg.mxu0
    %v1066 = vadd.f32 %v229, %v992
    %v1067 = vxor.u32 %v1066, 2147483648
    %v1068 = vmul.f32 %v1067, 1.442695
    %v1069 = vpow.pop %v1068
    %v1070 = vadd.f32 %v1069, 1.0
    %v1071 = vrcp.pop %v1070
    %v1072 = vmul.f32 1.0, %v1071
    %v1074 = vrot.slane %v229, 1
    %v1076 = vadd.f32 %v1074, %v994
    %v1077 = vxor.u32 %v1076, 2147483648
    %v1078 = vmul.f32 %v1077, 1.442695
    %v1079 = vpow.pop %v1078
    %v1080 = vadd.f32 %v1079, 1.0
    %v1081 = vrcp.pop %v1080
    %v1082 = vmul.f32 1.0, %v1081
    %v1083 = vadd.f32 %v1063, %v124
    %v1084 = vmul.f32 %v1072, %v1083
    %v1085 = vrot.slane %v229, 2
    %v1087 = vadd.f32 %v1085, %v1084
    %v1088 = vtanh.pop %v1087
    %v1089 = vsub.f32 1.0, %v1082
    %v1090 = vmul.f32 %v1089, %v1088
    %v1091 = vmul.f32 %v1082, %v922
    %v1092 = vadd.f32 %v1090, %v1091
    %1093 = vst [vmem:[#allocation2 + $0x4] sm:$0x1] %v1092
    %1094 = vst [vmem:[#allocation3 + $0x3] sm:$0x1] %v1092
    %1095 = vmatprep.subr.mxu0 %v122
    %1096 = vmatpush1.msra.mxu0 %v121
    %1097 = vmatprep.subr.mxu0 %v119
    %1098 = vmatpush1.msra.mxu0 %v118
    %1099 = vmatprep.subr.mxu0 %v116
    %1100 = vmatpush1.msra.mxu0 %v115
    %1101 = vmatprep.subr.mxu0 %v113
    %1102 = vmatpush1.msra.mxu0 %v112
    %1103 = vmatprep.subr.mxu0 %v110
    %1104 = vmatpush1.msra.mxu0 %v109
    %1105 = vmatprep.subr.mxu0 %v107
    %1106 = vmatpush1.msra.mxu0 %v106
    %1107 = vmatprep.subr.mxu0 %v104
    %1108 = vmatpush1.msra.mxu0 %v103
    %1109 = vmatprep.subr.mxu0 %v101
    %1110 = vmatpush1.msra.mxu0 %v100
    %1111 = vmatprep.subr.mxu0 %v98
    %1112 = vmatpush1.msra.mxu0 %v97
    %1113 = vmatprep.subr.mxu0 %v95
    %1114 = vmatpush1.msra.mxu0 %v94
    %1115 = vmatprep.subr.mxu0 %v92
    %1116 = vmatpush1.msra.mxu0 %v91
    %1117 = vmatprep.subr.mxu0 %v89
    %1118 = vmatpush1.msra.mxu0 %v88
    %1119 = vmatprep.subr.mxu0 %v86
    %1120 = vmatpush1.msra.mxu0 %v85
    %1121 = vmatprep.subr.mxu0 %v83
    %1122 = vmatpush1.msra.mxu0 %v82
    %1123 = vmatprep.subr.mxu0 %v80
    %1124 = vmatpush1.msra.mxu0 %v79
    %1125 = vmatprep.subr.mxu0 %v77
    %1126 = vmatpush1.msra.mxu0 %v76
    %1127 = vmatprep.subr.mxu0 0.0
    %1128 = vmatpush2.msra.mxu0 0.0
    %1129 = vmatprep.subr.mxu0 0.0
    %1130 = vmatpush2.msra.mxu0 0.0
    %1131 = vmatprep.subr.mxu0 0.0
    %1132 = vmatpush2.msra.mxu0 0.0
    %1133 = vmatprep.subr.mxu0 0.0
    %1134 = vmatpush2.msra.mxu0 0.0
    %1135 = vmatprep.subr.mxu0 0.0
    %1136 = vmatpush2.msra.mxu0 0.0
    %1137 = vmatprep.subr.mxu0 0.0
    %1138 = vmatpush2.msra.mxu0 0.0
    %1139 = vmatprep.subr.mxu0 0.0
    %1140 = vmatpush2.msra.mxu0 0.0
    %1141 = vmatprep.subr.mxu0 0.0
    %1142 = vmatpush2.msra.mxu0 0.0
    %1143 = vmatprep.subr.mxu0 0.0
    %1144 = vmatpush2.msra.mxu0 0.0
    %1145 = vmatprep.subr.mxu0 0.0
    %1146 = vmatpush2.msra.mxu0 0.0
    %1147 = vmatprep.subr.mxu0 0.0
    %1148 = vmatpush2.msra.mxu0 0.0
    %1149 = vmatprep.subr.mxu0 0.0
    %1150 = vmatpush2.msra.mxu0 0.0
    %1151 = vmatprep.subr.mxu0 0.0
    %1152 = vmatpush2.msra.mxu0 0.0
    %1153 = vmatprep.subr.mxu0 0.0
    %1154 = vmatpush2.msra.mxu0 0.0
    %1155 = vmatprep.subr.mxu0 0.0
    %1156 = vmatpush2.msra.mxu0 0.0
    %1157 = vmatprep.subr.mxu0 0.0
    %1158 = vmatpush2.msra.mxu0 0.0
    %1159 = vmatprep.mubr.f32.mxu0 0.0
    %1160 = vmatmul.mubr.f32.gmra.mxu0 %v1092
    %v1161 = vpop.f32.mrf.mxu0
    %v1162 = vadd.f32 0.0, %v1161
    %v1163 = vpop.f32.mrf.mxu0
    %v1164 = vadd.f32 0.0, %v1163
    %1165 = vdwg.mxu0
    %1166 = vmatprep.subr.mxu0 0.0
    %1167 = vmatpush1.msra.mxu0 %v123
    %1168 = vmatprep.subr.mxu0 0.0
    %1169 = vmatpush1.msra.mxu0 %v120
    %1170 = vmatprep.subr.mxu0 0.0
    %1171 = vmatpush1.msra.mxu0 %v117
    %1172 = vmatprep.subr.mxu0 0.0
    %1173 = vmatpush1.msra.mxu0 %v114
    %1174 = vmatprep.subr.mxu0 0.0
    %1175 = vmatpush1.msra.mxu0 %v111
    %1176 = vmatprep.subr.mxu0 0.0
    %1177 = vmatpush1.msra.mxu0 %v108
    %1178 = vmatprep.subr.mxu0 0.0
    %1179 = vmatpush1.msra.mxu0 %v105
    %1180 = vmatprep.subr.mxu0 0.0
    %1181 = vmatpush1.msra.mxu0 %v102
    %1182 = vmatprep.subr.mxu0 0.0
    %1183 = vmatpush1.msra.mxu0 %v99
    %1184 = vmatprep.subr.mxu0 0.0
    %1185 = vmatpush1.msra.mxu0 %v96
    %1186 = vmatprep.subr.mxu0 0.0
    %1187 = vmatpush1.msra.mxu0 %v93
    %1188 = vmatprep.subr.mxu0 0.0
    %1189 = vmatpush1.msra.mxu0 %v90
    %1190 = vmatprep.subr.mxu0 0.0
    %1191 = vmatpush1.msra.mxu0 %v87
    %1192 = vmatprep.subr.mxu0 0.0
    %1193 = vmatpush1.msra.mxu0 %v84
    %1194 = vmatprep.subr.mxu0 0.0
    %1195 = vmatpush1.msra.mxu0 %v81
    %1196 = vmatprep.subr.mxu0 0.0
    %1197 = vmatpush1.msra.mxu0 %v78
    %1198 = vmatprep.subr.mxu0 0.0
    %1199 = vmatpush2.msra.mxu0 0.0
    %1200 = vmatprep.subr.mxu0 0.0
    %1201 = vmatpush2.msra.mxu0 0.0
    %1202 = vmatprep.subr.mxu0 0.0
    %1203 = vmatpush2.msra.mxu0 0.0
    %1204 = vmatprep.subr.mxu0 0.0
    %1205 = vmatpush2.msra.mxu0 0.0
    %1206 = vmatprep.subr.mxu0 0.0
    %1207 = vmatpush2.msra.mxu0 0.0
    %1208 = vmatprep.subr.mxu0 0.0
    %1209 = vmatpush2.msra.mxu0 0.0
    %1210 = vmatprep.subr.mxu0 0.0
    %1211 = vmatpush2.msra.mxu0 0.0
    %1212 = vmatprep.subr.mxu0 0.0
    %1213 = vmatpush2.msra.mxu0 0.0
    %1214 = vmatprep.subr.mxu0 0.0
    %1215 = vmatpush2.msra.mxu0 0.0
    %1216 = vmatprep.subr.mxu0 0.0
    %1217 = vmatpush2.msra.mxu0 0.0
    %1218 = vmatprep.subr.mxu0 0.0
    %1219 = vmatpush2.msra.mxu0 0.0
    %1220 = vmatprep.subr.mxu0 0.0
    %1221 = vmatpush2.msra.mxu0 0.0
    %1222 = vmatprep.subr.mxu0 0.0
    %1223 = vmatpush2.msra.mxu0 0.0
    %1224 = vmatprep.subr.mxu0 0.0
    %1225 = vmatpush2.msra.mxu0 0.0
    %1226 = vmatprep.subr.mxu0 0.0
    %1227 = vmatpush2.msra.mxu0 0.0
    %1228 = vmatprep.subr.mxu0 0.0
    %1229 = vmatpush2.msra.mxu0 0.0
    %1230 = vmatprep.mubr.f32.mxu0 0.0
    %1231 = vmatmul.mubr.f32.gmra.mxu0 %v1092
    %v1232 = vpop.f32.mrf.mxu0
    %v1233 = vadd.f32 0.0, %v1232
    %v1234 = vpop.f32.mrf.mxu0
    %1235 = vdwg.mxu0
    %v1236 = vadd.f32 %v234, %v1162
    %v1237 = vxor.u32 %v1236, 2147483648
    %v1238 = vmul.f32 %v1237, 1.442695
    %v1239 = vpow.pop %v1238
    %v1240 = vadd.f32 %v1239, 1.0
    %v1241 = vrcp.pop %v1240
    %v1242 = vmul.f32 1.0, %v1241
    %v1244 = vrot.slane %v234, 1
    %v1246 = vadd.f32 %v1244, %v1164
    %v1247 = vxor.u32 %v1246, 2147483648
    %v1248 = vmul.f32 %v1247, 1.442695
    %v1249 = vpow.pop %v1248
    %v1250 = vadd.f32 %v1249, 1.0
    %v1251 = vrcp.pop %v1250
    %v1252 = vmul.f32 1.0, %v1251
    %v1253 = vadd.f32 %v1233, %v124
    %v1254 = vmul.f32 %v1242, %v1253
    %v1255 = vrot.slane %v234, 2
    %v1257 = vadd.f32 %v1255, %v1254
    %v1258 = vtanh.pop %v1257
    %v1259 = vsub.f32 1.0, %v1252
    %v1260 = vmul.f32 %v1259, %v1258
    %v1261 = vmul.f32 %v1252, %v1092
    %v1262 = vadd.f32 %v1260, %v1261
    %1263 = vst [vmem:[#allocation2 + $0x5] sm:$0x1] %v1262
    %1264 = vst [vmem:[#allocation3 + $0x2] sm:$0x1] %v1262
    %1265 = vmatprep.subr.mxu0 %v122
    %1266 = vmatpush1.msra.mxu0 %v121
    %1267 = vmatprep.subr.mxu0 %v119
    %1268 = vmatpush1.msra.mxu0 %v118
    %1269 = vmatprep.subr.mxu0 %v116
    %1270 = vmatpush1.msra.mxu0 %v115
    %1271 = vmatprep.subr.mxu0 %v113
    %1272 = vmatpush1.msra.mxu0 %v112
    %1273 = vmatprep.subr.mxu0 %v110
    %1274 = vmatpush1.msra.mxu0 %v109
    %1275 = vmatprep.subr.mxu0 %v107
    %1276 = vmatpush1.msra.mxu0 %v106
    %1277 = vmatprep.subr.mxu0 %v104
    %1278 = vmatpush1.msra.mxu0 %v103
    %1279 = vmatprep.subr.mxu0 %v101
    %1280 = vmatpush1.msra.mxu0 %v100
    %1281 = vmatprep.subr.mxu0 %v98
    %1282 = vmatpush1.msra.mxu0 %v97
    %1283 = vmatprep.subr.mxu0 %v95
    %1284 = vmatpush1.msra.mxu0 %v94
    %1285 = vmatprep.subr.mxu0 %v92
    %1286 = vmatpush1.msra.mxu0 %v91
    %1287 = vmatprep.subr.mxu0 %v89
    %1288 = vmatpush1.msra.mxu0 %v88
    %1289 = vmatprep.subr.mxu0 %v86
    %1290 = vmatpush1.msra.mxu0 %v85
    %1291 = vmatprep.subr.mxu0 %v83
    %1292 = vmatpush1.msra.mxu0 %v82
    %1293 = vmatprep.subr.mxu0 %v80
    %1294 = vmatpush1.msra.mxu0 %v79
    %1295 = vmatprep.subr.mxu0 %v77
    %1296 = vmatpush1.msra.mxu0 %v76
    %1297 = vmatprep.subr.mxu0 0.0
    %1298 = vmatpush2.msra.mxu0 0.0
    %1299 = vmatprep.subr.mxu0 0.0
    %1300 = vmatpush2.msra.mxu0 0.0
    %1301 = vmatprep.subr.mxu0 0.0
    %1302 = vmatpush2.msra.mxu0 0.0
    %1303 = vmatprep.subr.mxu0 0.0
    %1304 = vmatpush2.msra.mxu0 0.0
    %1305 = vmatprep.subr.mxu0 0.0
    %1306 = vmatpush2.msra.mxu0 0.0
    %1307 = vmatprep.subr.mxu0 0.0
    %1308 = vmatpush2.msra.mxu0 0.0
    %1309 = vmatprep.subr.mxu0 0.0
    %1310 = vmatpush2.msra.mxu0 0.0
    %1311 = vmatprep.subr.mxu0 0.0
    %1312 = vmatpush2.msra.mxu0 0.0
    %1313 = vmatprep.subr.mxu0 0.0
    %1314 = vmatpush2.msra.mxu0 0.0
    %1315 = vmatprep.subr.mxu0 0.0
    %1316 = vmatpush2.msra.mxu0 0.0
    %1317 = vmatprep.subr.mxu0 0.0
    %1318 = vmatpush2.msra.mxu0 0.0
    %1319 = vmatprep.subr.mxu0 0.0
    %1320 = vmatpush2.msra.mxu0 0.0
    %1321 = vmatprep.subr.mxu0 0.0
    %1322 = vmatpush2.msra.mxu0 0.0
    %1323 = vmatprep.subr.mxu0 0.0
    %1324 = vmatpush2.msra.mxu0 0.0
    %1325 = vmatprep.subr.mxu0 0.0
    %1326 = vmatpush2.msra.mxu0 0.0
    %1327 = vmatprep.subr.mxu0 0.0
    %1328 = vmatpush2.msra.mxu0 0.0
    %1329 = vmatprep.mubr.f32.mxu0 0.0
    %1330 = vmatmul.mubr.f32.gmra.mxu0 %v1262
    %v1331 = vpop.f32.mrf.mxu0
    %v1332 = vadd.f32 0.0, %v1331
    %v1333 = vpop.f32.mrf.mxu0
    %v1334 = vadd.f32 0.0, %v1333
    %1335 = vdwg.mxu0
    %1336 = vmatprep.subr.mxu0 0.0
    %1337 = vmatpush1.msra.mxu0 %v123
    %1338 = vmatprep.subr.mxu0 0.0
    %1339 = vmatpush1.msra.mxu0 %v120
    %1340 = vmatprep.subr.mxu0 0.0
    %1341 = vmatpush1.msra.mxu0 %v117
    %1342 = vmatprep.subr.mxu0 0.0
    %1343 = vmatpush1.msra.mxu0 %v114
    %1344 = vmatprep.subr.mxu0 0.0
    %1345 = vmatpush1.msra.mxu0 %v111
    %1346 = vmatprep.subr.mxu0 0.0
    %1347 = vmatpush1.msra.mxu0 %v108
    %1348 = vmatprep.subr.mxu0 0.0
    %1349 = vmatpush1.msra.mxu0 %v105
    %1350 = vmatprep.subr.mxu0 0.0
    %1351 = vmatpush1.msra.mxu0 %v102
    %1352 = vmatprep.subr.mxu0 0.0
    %1353 = vmatpush1.msra.mxu0 %v99
    %1354 = vmatprep.subr.mxu0 0.0
    %1355 = vmatpush1.msra.mxu0 %v96
    %1356 = vmatprep.subr.mxu0 0.0
    %1357 = vmatpush1.msra.mxu0 %v93
    %1358 = vmatprep.subr.mxu0 0.0
    %1359 = vmatpush1.msra.mxu0 %v90
    %1360 = vmatprep.subr.mxu0 0.0
    %1361 = vmatpush1.msra.mxu0 %v87
    %1362 = vmatprep.subr.mxu0 0.0
    %1363 = vmatpush1.msra.mxu0 %v84
    %1364 = vmatprep.subr.mxu0 0.0
    %1365 = vmatpush1.msra.mxu0 %v81
    %1366 = vmatprep.subr.mxu0 0.0
    %1367 = vmatpush1.msra.mxu0 %v78
    %1368 = vmatprep.subr.mxu0 0.0
    %1369 = vmatpush2.msra.mxu0 0.0
    %1370 = vmatprep.subr.mxu0 0.0
    %1371 = vmatpush2.msra.mxu0 0.0
    %1372 = vmatprep.subr.mxu0 0.0
    %1373 = vmatpush2.msra.mxu0 0.0
    %1374 = vmatprep.subr.mxu0 0.0
    %1375 = vmatpush2.msra.mxu0 0.0
    %1376 = vmatprep.subr.mxu0 0.0
    %1377 = vmatpush2.msra.mxu0 0.0
    %1378 = vmatprep.subr.mxu0 0.0
    %1379 = vmatpush2.msra.mxu0 0.0
    %1380 = vmatprep.subr.mxu0 0.0
    %1381 = vmatpush2.msra.mxu0 0.0
    %1382 = vmatprep.subr.mxu0 0.0
    %1383 = vmatpush2.msra.mxu0 0.0
    %1384 = vmatprep.subr.mxu0 0.0
    %1385 = vmatpush2.msra.mxu0 0.0
    %1386 = vmatprep.subr.mxu0 0.0
    %1387 = vmatpush2.msra.mxu0 0.0
    %1388 = vmatprep.subr.mxu0 0.0
    %1389 = vmatpush2.msra.mxu0 0.0
    %1390 = vmatprep.subr.mxu0 0.0
    %1391 = vmatpush2.msra.mxu0 0.0
    %1392 = vmatprep.subr.mxu0 0.0
    %1393 = vmatpush2.msra.mxu0 0.0
    %1394 = vmatprep.subr.mxu0 0.0
    %1395 = vmatpush2.msra.mxu0 0.0
    %1396 = vmatprep.subr.mxu0 0.0
    %1397 = vmatpush2.msra.mxu0 0.0
    %1398 = vmatprep.subr.mxu0 0.0
    %1399 = vmatpush2.msra.mxu0 0.0
    %1400 = vmatprep.mubr.f32.mxu0 0.0
    %1401 = vmatmul.mubr.f32.gmra.mxu0 %v1262
    %v1402 = vpop.f32.mrf.mxu0
    %v1403 = vadd.f32 0.0, %v1402
    %v1404 = vpop.f32.mrf.mxu0
    %1405 = vdwg.mxu0
    %v1406 = vadd.f32 %v239, %v1332
    %v1407 = vxor.u32 %v1406, 2147483648
    %v1408 = vmul.f32 %v1407, 1.442695
    %v1409 = vpow.pop %v1408
    %v1410 = vadd.f32 %v1409, 1.0
    %v1411 = vrcp.pop %v1410
    %v1412 = vmul.f32 1.0, %v1411
    %v1414 = vrot.slane %v239, 1
    %v1416 = vadd.f32 %v1414, %v1334
    %v1417 = vxor.u32 %v1416, 2147483648
    %v1418 = vmul.f32 %v1417, 1.442695
    %v1419 = vpow.pop %v1418
    %v1420 = vadd.f32 %v1419, 1.0
    %v1421 = vrcp.pop %v1420
    %v1422 = vmul.f32 1.0, %v1421
    %v1423 = vadd.f32 %v1403, %v124
    %v1424 = vmul.f32 %v1412, %v1423
    %v1425 = vrot.slane %v239, 2
    %v1427 = vadd.f32 %v1425, %v1424
    %v1428 = vtanh.pop %v1427
    %v1429 = vsub.f32 1.0, %v1422
    %v1430 = vmul.f32 %v1429, %v1428
    %v1431 = vmul.f32 %v1422, %v1262
    %v1432 = vadd.f32 %v1430, %v1431
    %1433 = vst [vmem:[#allocation2 + $0x6] sm:$0x1] %v1432
    %1434 = vst [vmem:[#allocation3 + $0x1] sm:$0x1] %v1432
    %1435 = vmatprep.subr.mxu0 %v122
    %1436 = vmatpush1.msra.mxu0 %v121
    %1437 = vmatprep.subr.mxu0 %v119
    %1438 = vmatpush1.msra.mxu0 %v118
    %1439 = vmatprep.subr.mxu0 %v116
    %1440 = vmatpush1.msra.mxu0 %v115
    %1441 = vmatprep.subr.mxu0 %v113
    %1442 = vmatpush1.msra.mxu0 %v112
    %1443 = vmatprep.subr.mxu0 %v110
    %1444 = vmatpush1.msra.mxu0 %v109
    %1445 = vmatprep.subr.mxu0 %v107
    %1446 = vmatpush1.msra.mxu0 %v106
    %1447 = vmatprep.subr.mxu0 %v104
    %1448 = vmatpush1.msra.mxu0 %v103
    %1449 = vmatprep.subr.mxu0 %v101
    %1450 = vmatpush1.msra.mxu0 %v100
    %1451 = vmatprep.subr.mxu0 %v98
    %1452 = vmatpush1.msra.mxu0 %v97
    %1453 = vmatprep.subr.mxu0 %v95
    %1454 = vmatpush1.msra.mxu0 %v94
    %1455 = vmatprep.subr.mxu0 %v92
    %1456 = vmatpush1.msra.mxu0 %v91
    %1457 = vmatprep.subr.mxu0 %v89
    %1458 = vmatpush1.msra.mxu0 %v88
    %1459 = vmatprep.subr.mxu0 %v86
    %1460 = vmatpush1.msra.mxu0 %v85
    %1461 = vmatprep.subr.mxu0 %v83
    %1462 = vmatpush1.msra.mxu0 %v82
    %1463 = vmatprep.subr.mxu0 %v80
    %1464 = vmatpush1.msra.mxu0 %v79
    %1465 = vmatprep.subr.mxu0 %v77
    %1466 = vmatpush1.msra.mxu0 %v76
    %1467 = vmatprep.subr.mxu0 0.0
    %1468 = vmatpush2.msra.mxu0 0.0
    %1469 = vmatprep.subr.mxu0 0.0
    %1470 = vmatpush2.msra.mxu0 0.0
    %1471 = vmatprep.subr.mxu0 0.0
    %1472 = vmatpush2.msra.mxu0 0.0
    %1473 = vmatprep.subr.mxu0 0.0
    %1474 = vmatpush2.msra.mxu0 0.0
    %1475 = vmatprep.subr.mxu0 0.0
    %1476 = vmatpush2.msra.mxu0 0.0
    %1477 = vmatprep.subr.mxu0 0.0
    %1478 = vmatpush2.msra.mxu0 0.0
    %1479 = vmatprep.subr.mxu0 0.0
    %1480 = vmatpush2.msra.mxu0 0.0
    %1481 = vmatprep.subr.mxu0 0.0
    %1482 = vmatpush2.msra.mxu0 0.0
    %1483 = vmatprep.subr.mxu0 0.0
    %1484 = vmatpush2.msra.mxu0 0.0
    %1485 = vmatprep.subr.mxu0 0.0
    %1486 = vmatpush2.msra.mxu0 0.0
    %1487 = vmatprep.subr.mxu0 0.0
    %1488 = vmatpush2.msra.mxu0 0.0
    %1489 = vmatprep.subr.mxu0 0.0
    %1490 = vmatpush2.msra.mxu0 0.0
    %1491 = vmatprep.subr.mxu0 0.0
    %1492 = vmatpush2.msra.mxu0 0.0
    %1493 = vmatprep.subr.mxu0 0.0
    %1494 = vmatpush2.msra.mxu0 0.0
    %1495 = vmatprep.subr.mxu0 0.0
    %1496 = vmatpush2.msra.mxu0 0.0
    %1497 = vmatprep.subr.mxu0 0.0
    %1498 = vmatpush2.msra.mxu0 0.0
    %1499 = vmatprep.mubr.f32.mxu0 0.0
    %1500 = vmatmul.mubr.f32.gmra.mxu0 %v1432
    %v1501 = vpop.f32.mrf.mxu0
    %v1502 = vadd.f32 0.0, %v1501
    %v1503 = vpop.f32.mrf.mxu0
    %v1504 = vadd.f32 0.0, %v1503
    %1505 = vdwg.mxu0
    %1506 = vmatprep.subr.mxu0 0.0
    %1507 = vmatpush1.msra.mxu0 %v123
    %1508 = vmatprep.subr.mxu0 0.0
    %1509 = vmatpush1.msra.mxu0 %v120
    %1510 = vmatprep.subr.mxu0 0.0
    %1511 = vmatpush1.msra.mxu0 %v117
    %1512 = vmatprep.subr.mxu0 0.0
    %1513 = vmatpush1.msra.mxu0 %v114
    %1514 = vmatprep.subr.mxu0 0.0
    %1515 = vmatpush1.msra.mxu0 %v111
    %1516 = vmatprep.subr.mxu0 0.0
    %1517 = vmatpush1.msra.mxu0 %v108
    %1518 = vmatprep.subr.mxu0 0.0
    %1519 = vmatpush1.msra.mxu0 %v105
    %1520 = vmatprep.subr.mxu0 0.0
    %1521 = vmatpush1.msra.mxu0 %v102
    %1522 = vmatprep.subr.mxu0 0.0
    %1523 = vmatpush1.msra.mxu0 %v99
    %1524 = vmatprep.subr.mxu0 0.0
    %1525 = vmatpush1.msra.mxu0 %v96
    %1526 = vmatprep.subr.mxu0 0.0
    %1527 = vmatpush1.msra.mxu0 %v93
    %1528 = vmatprep.subr.mxu0 0.0
    %1529 = vmatpush1.msra.mxu0 %v90
    %1530 = vmatprep.subr.mxu0 0.0
    %1531 = vmatpush1.msra.mxu0 %v87
    %1532 = vmatprep.subr.mxu0 0.0
    %1533 = vmatpush1.msra.mxu0 %v84
    %1534 = vmatprep.subr.mxu0 0.0
    %1535 = vmatpush1.msra.mxu0 %v81
    %1536 = vmatprep.subr.mxu0 0.0
    %1537 = vmatpush1.msra.mxu0 %v78
    %1538 = vmatprep.subr.mxu0 0.0
    %1539 = vmatpush2.msra.mxu0 0.0
    %1540 = vmatprep.subr.mxu0 0.0
    %1541 = vmatpush2.msra.mxu0 0.0
    %1542 = vmatprep.subr.mxu0 0.0
    %1543 = vmatpush2.msra.mxu0 0.0
    %1544 = vmatprep.subr.mxu0 0.0
    %1545 = vmatpush2.msra.mxu0 0.0
    %1546 = vmatprep.subr.mxu0 0.0
    %1547 = vmatpush2.msra.mxu0 0.0
    %1548 = vmatprep.subr.mxu0 0.0
    %1549 = vmatpush2.msra.mxu0 0.0
    %1550 = vmatprep.subr.mxu0 0.0
    %1551 = vmatpush2.msra.mxu0 0.0
    %1552 = vmatprep.subr.mxu0 0.0
    %1553 = vmatpush2.msra.mxu0 0.0
    %1554 = vmatprep.subr.mxu0 0.0
    %1555 = vmatpush2.msra.mxu0 0.0
    %1556 = vmatprep.subr.mxu0 0.0
    %1557 = vmatpush2.msra.mxu0 0.0
    %1558 = vmatprep.subr.mxu0 0.0
    %1559 = vmatpush2.msra.mxu0 0.0
    %1560 = vmatprep.subr.mxu0 0.0
    %1561 = vmatpush2.msra.mxu0 0.0
    %1562 = vmatprep.subr.mxu0 0.0
    %1563 = vmatpush2.msra.mxu0 0.0
    %1564 = vmatprep.subr.mxu0 0.0
    %1565 = vmatpush2.msra.mxu0 0.0
    %1566 = vmatprep.subr.mxu0 0.0
    %1567 = vmatpush2.msra.mxu0 0.0
    %1568 = vmatprep.subr.mxu0 0.0
    %1569 = vmatpush2.msra.mxu0 0.0
    %1570 = vmatprep.mubr.f32.mxu0 0.0
    %1571 = vmatmul.mubr.f32.gmra.mxu0 %v1432
    %v1572 = vpop.f32.mrf.mxu0
    %v1573 = vadd.f32 0.0, %v1572
    %v1574 = vpop.f32.mrf.mxu0
    %1575 = vdwg.mxu0
    %v1576 = vadd.f32 %v244, %v1502
    %v1577 = vxor.u32 %v1576, 2147483648
    %v1578 = vmul.f32 %v1577, 1.442695
    %v1579 = vpow.pop %v1578
    %v1580 = vadd.f32 %v1579, 1.0
    %v1581 = vrcp.pop %v1580
    %v1582 = vmul.f32 1.0, %v1581
    %v1584 = vrot.slane %v244, 1
    %v1586 = vadd.f32 %v1584, %v1504
    %v1587 = vxor.u32 %v1586, 2147483648
    %v1588 = vmul.f32 %v1587, 1.442695
    %v1589 = vpow.pop %v1588
    %v1590 = vadd.f32 %v1589, 1.0
    %v1591 = vrcp.pop %v1590
    %v1592 = vmul.f32 1.0, %v1591
    %v1593 = vadd.f32 %v1573, %v124
    %v1594 = vmul.f32 %v1582, %v1593
    %v1595 = vrot.slane %v244, 2
    %v1597 = vadd.f32 %v1595, %v1594
    %v1598 = vtanh.pop %v1597
    %v1599 = vsub.f32 1.0, %v1592
    %v1600 = vmul.f32 %v1599, %v1598
    %v1601 = vmul.f32 %v1592, %v1432
    %v1602 = vadd.f32 %v1600, %v1601
    %1603 = vst [vmem:[#allocation2 + $0x7] sm:$0x1] %v1602
    %1604 = vst [vmem:[#allocation3] sm:$0x1] %v1602
    %v1605 = vld [vmem:[#allocation2] sm:$0xff]
    %vm1606 = vcmask 121856
    %1607 = vst.msk [vmem:[#allocation12] sm:$0xff] %vm1606, %v1605
    %v1608 = vld [vmem:[#allocation3] sm:$0xff]
    %vm1609 = vcmask 244856
    %1610 = vst.msk [vmem:[#allocation12] sm:$0xff] %vm1609, %v1608
    %vm1611 = vcmask 114688
    %1612 = vst.msk [vmem:[#allocation13] sm:$0x1] %vm1611, %v1602
    %v1614 = vlaneseq
    %v1615 = vshrl.u32 %v1614, 7
    %v1616 = vsub.s32 0, %v1615
    %v1617 = vrot.slane %v1602, %v1616
    %1618 = vrot.lane.b32.xlu0 %v1617, 113
    %v1619 = vpop.permute.xlu0 %1618
    %1621 = vst.msk [vmem:[#allocation13 + $0x1] sm:$0x1] %vm1611, %v1619
    // Predicated region
    $region38: #{_lambda_.1} parent=1 // pred_check
      _
    $region39: #{_lambda_.1} parent=1 // pred_check_branch
      %1623 = sbr.rel (0) target = $region41
    $region40: #{_lambda_.1} parent=1 // pred_region
      %s1625 = ssub.s32 128, 128
      %1626 = vsyncadd [#allocation6], %s1625
      %s1628 = sshll.u32 [#allocation12], 4
      %s1629 = int_to_ptr.vmem [resolvable:$true] %s1628
      %1631 = dma.vmem_to_hbm [thread:$0]  %s1629, 128, %s5, [#allocation6]
    $region41: #{_lambda_.1} parent=1 // pred_fallthru
      _
    // Predicated region
    $region42: #{_lambda_.1} parent=1 // pred_check
      _
    $region43: #{_lambda_.1} parent=1 // pred_check_branch
      %1633 = sbr.rel (0) target = $region45
    $region44: #{_lambda_.1} parent=1 // pred_region
      %s1635 = ssub.s32 32, 32
      %1636 = vsyncadd [#allocation14], %s1635
      %s1638 = sshll.u32 [#allocation13], 4
      %s1639 = int_to_ptr.vmem [resolvable:$true] %s1638
      %1641 = dma.vmem_to_hbm [thread:$0]  %s1639, 32, %s6, [#allocation14]
    $region45: #{_lambda_.1} parent=1 // pred_fallthru
      _
    // Predicated region
    $region46: #{_lambda_.1} parent=1 // pred_check
      _
    $region47: #{_lambda_.1} parent=1 // pred_check_branch
      %1643 = sbr.rel (0) target = $region49
    $region48: #{_lambda_.1} parent=1 // pred_region
      %1644 = dma.done [#allocation6], 128
    $region49: #{_lambda_.1} parent=1 // pred_fallthru
      _
    // Predicated region
    $region50: #{_lambda_.1} parent=1 // pred_check
      _
    $region51: #{_lambda_.1} parent=1 // pred_check_branch
      %1646 = sbr.rel (0) target = $region53
    $region52: #{_lambda_.1} parent=1 // pred_region
      %1647 = dma.done [#allocation14], 32
    $region53: #{_lambda_.1} parent=1 // pred_fallthru
      _
    %1648 = vsyncpa [#allocation5], 1
    %1649 = vsyncpa [#allocation10], 1
    %1650 = vsyncpa [#allocation6], 1
    %1651 = vsyncpa [#allocation14], 1
    %1652 = vsyncpa [#allocation7], 1

</llo_original>
